<compile_context>
chip_gen: v7x
topology: tpu7x:2x2x1
jax: 0.10.0
libtpu: 0.0.40
codegen_flags: <defaults>
</compile_context>

<pallas_src>
import functools

import jax
import jax.numpy as jnp
from jax.experimental import pallas as pl
from jax.experimental.pallas import tpu as pltpu

EPS = 1e-5
_LANE = 128
_SUBLANE = 8


def _round_up(n, m):
    return ((n + m - 1) // m) * m


# ----------------------------- kernel ----------------------------------------


def encoder_kernel(x_ref, w_ref, out_ref, *, meta, e_layers, fac_C, norm,
                   short_res, long_res):
    """Whole FFVE encoder in one VMEM-resident kernel.

    x_ref : (B, C, S) token-major input (transposed once on the host).
    w_ref : (R, W) single zero-padded f32 weight slab; every parameter is a
            static slice (row offsets are multiples of 8).
    out_ref: (B, OUTW) lane-dense output; cols [0, 2*latent) hold mu|logvar.
    """

    def blk(name):
        off, r, c = meta[name]                  # static Python ints -> free view
        return w_ref[off:off + r, 0:c]

    x = x_ref[...].astype(jnp.float32)          # (B, C, S)
    B, C, S = x.shape

    def layernorm(v, g, b):                     # LN over the channel (sublane) axis
        mean = jnp.mean(v, axis=1, keepdims=True)
        var = jnp.mean(jnp.square(v - mean), axis=1, keepdims=True)
        return (v - mean) * jax.lax.rsqrt(var + EPS) * g[None, :, :] + b[None, :, :]

    def channel_mlp(v, l):
        # Factorized channel mixing (C -> 2 -> 7 -> C) on the VPU: these dots are far
        # too small to amortize MXU push/pop latency, so contract over the channel
        # axis with unrolled broadcast-MACs (weights stored transposed, biases as
        # columns, so no in-kernel relayout is needed).
        def dense(u, wT, bc):
            n_in = wT.shape[1]
            acc = None
            for i in range(n_in):
                term = u[:, i:i + 1, :] * wT[:, i:i + 1][None, :, :]
                acc = term if acc is None else acc + term
            return acc + bc[None, :, :]

        h = jnp.tanh(dense(v, blk(f"cw1T{l}"), blk(f"cb1c{l}")))
        h = jnp.tanh(dense(h, blk(f"cw2T{l}"), blk(f"cb2c{l}")))
        return dense(h, blk(f"cw3T{l}"), blk(f"cb3c{l}"))

    mixer = x
    for l in range(e_layers):                   # static unroll; weight views are free
        if norm:
            g, bt = blk(f"gamma{l}"), blk(f"beta{l}")
            y = layernorm(mixer, g, bt)
        else:
            g = bt = None
            y = mixer

        # Token mixing over S, batched as (B*C, S) rows; hidden dims are zero-padded
        # to 256/128 lanes so every dot is an unmasked lane-dense MXU pass.
        yt = y.reshape(B * C, S)
        h = jnp.tanh(jnp.dot(yt, blk(f"tw1{l}"), preferred_element_type=jnp.float32)
                     + blk(f"tb1{l}"))
        h = jnp.tanh(jnp.dot(h, blk(f"tw2{l}"), preferred_element_type=jnp.float32)
                     + blk(f"tb2{l}"))
        t = jnp.dot(h, blk(f"tw3{l}"), preferred_element_type=jnp.float32) + blk(f"tb3{l}")
        y = t.reshape(B, C, S)

        if fac_C:
            if short_res:
                y = y + mixer
                res = y
                y2 = layernorm(y, g, bt) if norm else y
                y = res + channel_mlp(y2, l)
            else:
                y = channel_mlp(y, l)
        mixer = y

    # Flatten: the token-major layout makes a plain reshape match PyTorch's
    # transpose(1, 2).reshape(B, -1) (c*S + s) order — no in-kernel transpose.
    m_flat = mixer.reshape(B, C * S)
    xm = jnp.concatenate([x.reshape(B, C * S), m_flat], axis=-1) if long_res else m_flat

    # TODO(synk): nn.Dropout(0.5)/nn.Dropout(0.2) are identity here (eval-mode).
    # Fused mu|logvar heads: ONE dot over the concatenated residual+mixer slab,
    # then a block-diagonal second dot into a 128-wide lane-dense output.
    h = jnp.tanh(jnp.dot(xm, blk("hw1"), preferred_element_type=jnp.float32) + blk("hb1"))
    out = jnp.dot(h, blk("hw2"), preferred_element_type=jnp.float32) + blk("hb2")
    out_ref[...] = out.astype(out_ref.dtype)


# ----------------------------- wrapper ----------------------------------------


def encoder_forward(x, slab, meta, *, latent_dim, e_layers, fac_C=True, norm=True,
                    short_res=True, long_res=True):
    B = x.shape[0]
    out_width = meta["hw2"][2]                       # lane-dense padded 2*latent
    x_t = jnp.transpose(x, (0, 2, 1))                # (B, C, S): one host-side transpose
    kernel = functools.partial(
        encoder_kernel, meta=meta, e_layers=e_layers, fac_C=fac_C, norm=norm,
        short_res=short_res, long_res=long_res)
    vmem = pl.BlockSpec(memory_space=pltpu.MemorySpace.VMEM)   # whole array in VMEM
    # Grid-less on purpose: total work is a few hundred KFLOPs.  For large B on
    # v7x, add a batch grid with dimension_semantics=("parallel",) to use both TCs.
    out = pl.pallas_call(
        kernel,
        out_shape=jax.ShapeDtypeStruct((B, out_width), x.dtype),
        in_specs=[vmem, vmem],
        out_specs=vmem,
    )(x_t, slab)
    return out[:, :latent_dim], out[:, latent_dim:2 * latent_dim]


# ----------------------------- host-side packing -------------------------------


def pack_params(params, *, S, C, latent_dim, long_res=True):
    """Pack every weight into ONE zero-padded f32 slab (single DMA) + static meta.

    - Token-mixing matrices/biases are lane-padded (210->256, 90->128); padded bias
      entries and padded rows of the next weight are zero, so tanh(0)=0 is inert.
    - Channel-mixing weights are stored transposed (out,in) and biases/gamma/beta
      as columns, matching the kernel's VPU broadcast-MAC path with no relayout.
    - fc_mu/fc_logvar are fused: w1 column-concat, w2 block-diagonal, output padded
      to a 128-lane slab.
    """
    blocks = params["blocks"]
    h1 = blocks[0]["tw1"].shape[1]
    h2 = blocks[0]["tw2"].shape[1]
    T1 = _round_up(h1, _LANE)
    T2 = _round_up(h2, _LANE)

    hm, hl = params["fc_mu"], params["fc_logvar"]
    in_dim = hm["w1"].shape[0]
    H = hm["w1"].shape[1]
    L = latent_dim
    Hp = _round_up(2 * H, _LANE)
    OUTW = _round_up(2 * L, _LANE)
    W = max(T1, T2, Hp, OUTW, _round_up(S, _LANE), _LANE)

    def pad2(a, shape):
        a = jnp.asarray(a, jnp.float32)
        out = jnp.zeros(shape, jnp.float32)
        return out.at[:a.shape[0], :a.shape[1]].set(a)

    entries = []
    for l, b in enumerate(blocks):
        entries += [
            (f"tw1{l}", pad2(b["tw1"], (S, T1))),
            (f"tb1{l}", pad2(b["tb1"], (1, T1))),
            (f"tw2{l}", pad2(b["tw2"], (T1, T2))),
            (f"tb2{l}", pad2(b["tb2"], (1, T2))),
            (f"tw3{l}", pad2(b["tw3"], (T2, S))),
            (f"tb3{l}", jnp.asarray(b["tb3"], jnp.float32)),
            (f"cw1T{l}", jnp.asarray(b["cw1"], jnp.float32).T),
            (f"cb1c{l}", jnp.asarray(b["cb1"], jnp.float32).T),
            (f"cw2T{l}", jnp.asarray(b["cw2"], jnp.float32).T),
            (f"cb2c{l}", jnp.asarray(b["cb2"], jnp.float32).T),
            (f"cw3T{l}", jnp.asarray(b["cw3"], jnp.float32).T),
            (f"cb3c{l}", jnp.asarray(b["cb3"], jnp.float32).T),
            (f"gamma{l}", jnp.asarray(b["gamma"], jnp.float32).T),
            (f"beta{l}", jnp.asarray(b["beta"], jnp.float32).T),
        ]

    # Fused heads.  Row order of w1 already matches concat([x_flat, mixer_flat]) in
    # the token-major (c*S + s) flatten order, so no permutation is needed.
    w1 = jnp.concatenate([hm["w1"], hl["w1"]], axis=1)            # (in_dim, 2H)
    b1 = jnp.concatenate([hm["b1"], hl["b1"]], axis=1)            # (1, 2H)
    w2 = jnp.zeros((2 * H, 2 * L), jnp.float32)
    w2 = w2.at[:H, :L].set(hm["w2"]).at[H:, L:].set(hl["w2"])     # block-diagonal
    b2 = jnp.concatenate([hm["b2"], hl["b2"]], axis=1)            # (1, 2L)
    entries += [
        ("hw1", pad2(w1, (in_dim, Hp))),
        ("hb1", pad2(b1, (1, Hp))),
        ("hw2", pad2(w2, (Hp, OUTW))),
        ("hb2", pad2(b2, (1, OUTW))),
    ]

    meta = {}
    chunks = []
    row = 0
    for name, arr in entries:
        r, c = arr.shape
        nr = _round_up(r, _SUBLANE)
        chunks.append(jnp.zeros((nr, W), jnp.float32).at[:r, :c].set(arr))
        meta[name] = (row, r, c)
        row += nr
    slab = jnp.concatenate(chunks, axis=0)
    return slab, meta


# ----------------------------- reference (pure JAX) ----------------------------


def encoder_reference(x, params, *, fac_C=True, norm=True, short_res=True, long_res=True):
    def ln(v, g, b):
        m = v.mean(-1, keepdims=True)
        var = ((v - m) ** 2).mean(-1, keepdims=True)
        return (v - m) / jnp.sqrt(var + EPS) * g + b

    def mlp(v, w1, b1, w2, b2, w3, b3):
        h = jnp.tanh(v @ w1 + b1)
        h = jnp.tanh(h @ w2 + b2)
        return h @ w3 + b3

    mixer_x = x
    for p in params["blocks"]:
        y = ln(mixer_x, p["gamma"], p["beta"]) if norm else mixer_x
        y = jnp.swapaxes(
            mlp(jnp.swapaxes(y, 1, 2), p["tw1"], p["tb1"], p["tw2"], p["tb2"], p["tw3"], p["tb3"]),
            1, 2,
        )
        if fac_C:
            if short_res:
                y = y + mixer_x
                resid = y
                y2 = ln(y, p["gamma"], p["beta"]) if norm else y
                y = resid + mlp(y2, p["cw1"], p["cb1"], p["cw2"], p["cb2"], p["cw3"], p["cb3"])
            else:
                y = mlp(y, p["cw1"], p["cb1"], p["cw2"], p["cb2"], p["cw3"], p["cb3"])
        mixer_x = y

    B = x.shape[0]
    res = jnp.transpose(x, (0, 2, 1)).reshape(B, -1)
    flat = jnp.transpose(mixer_x, (0, 2, 1)).reshape(B, -1)
    if long_res:
        flat = jnp.concatenate([res, flat], axis=-1)
    hm = params["fc_mu"]
    hl = params["fc_logvar"]
    mu = jnp.tanh(flat @ hm["w1"] + hm["b1"]) @ hm["w2"] + hm["b2"]
    lv = jnp.tanh(flat @ hl["w1"] + hl["b1"]) @ hl["w2"] + hl["b2"]
    return mu, lv


# ----------------------------- params ------------------------------------------


def _linear(key, din, dout):
    k1, k2 = jax.random.split(key)
    scale = 1.0 / jnp.sqrt(jnp.float32(din))
    w = jax.random.uniform(k1, (din, dout), jnp.float32, -scale, scale)
    b = jax.random.uniform(k2, (1, dout), jnp.float32, -scale, scale)
    return w, b


def init_params(key, S, C, latent_dim, e_layers, *, hidden_num=(210, 90),
                ch_hidden=(2, 7), long_res=True):
    assert C > max(ch_hidden)  # mirrors FactorizedChannelMixing asserts
    blocks = []
    for _ in range(e_layers):
        key, *ks = jax.random.split(key, 7)
        tw1, tb1 = _linear(ks[0], S, hidden_num[0])
        tw2, tb2 = _linear(ks[1], hidden_num[0], hidden_num[1])
        tw3, tb3 = _linear(ks[2], hidden_num[1], S)
        cw1, cb1 = _linear(ks[3], C, ch_hidden[0])
        cw2, cb2 = _linear(ks[4], ch_hidden[0], ch_hidden[1])
        cw3, cb3 = _linear(ks[5], ch_hidden[1], C)
        blocks.append(dict(
            tw1=tw1, tb1=tb1, tw2=tw2, tb2=tb2, tw3=tw3, tb3=tb3,
            cw1=cw1, cb1=cb1, cw2=cw2, cb2=cb2, cw3=cw3, cb3=cb3,
            gamma=jnp.ones((1, C), jnp.float32),
            beta=jnp.zeros((1, C), jnp.float32),
        ))

    in_dim = S * C * 2 if long_res else S * C
    hid = (S * C) // 2
    key, k1, k2, k3, k4 = jax.random.split(key, 5)
    mw1, mb1 = _linear(k1, in_dim, hid)
    mw2, mb2 = _linear(k2, hid, latent_dim)
    lw1, lb1 = _linear(k3, in_dim, hid)
    lw2, lb2 = _linear(k4, hid, latent_dim)
    return dict(
        blocks=blocks,
        fc_mu=dict(w1=mw1, b1=mb1, w2=mw2, b2=mb2),
        fc_logvar=dict(w1=lw1, b1=lb1, w2=lw2, b2=lb2),
    )


# ----------------------------- main ---------------------------------------------


if __name__ == "__main__":
    B, S, C, LATENT, E_LAYERS = 2, 16, 8, 2, 2  # C > 7 required by fac_C asserts

    key = jax.random.PRNGKey(0)
    kx, kp = jax.random.split(key)
    x = jax.random.normal(kx, (B, S, C), jnp.float32)
    params = init_params(kp, S, C, LATENT, E_LAYERS, long_res=True)
    slab, meta = pack_params(params, S=S, C=C, latent_dim=LATENT, long_res=True)

    mu, logvar = encoder_forward(x, slab, meta, latent_dim=LATENT, e_layers=E_LAYERS,
                                 fac_C=True, norm=True, short_res=True, long_res=True)
    jax.block_until_ready((mu, logvar))

    mu_ref, logvar_ref = encoder_reference(x, params)
    assert mu.shape == (B, LATENT) and logvar.shape == (B, LATENT)
    assert jnp.allclose(mu, mu_ref, atol=1e-3, rtol=1e-3)
    assert jnp.allclose(logvar, logvar_ref, atol=1e-3, rtol=1e-3)

    print("KERNEL_OK")
</pallas_src>

<mosaic_0001>
module attributes {stable_mosaic.version = 11 : i64} {
  func.func @encoder_kernel(%arg0: memref<2x8x16xf32, #tpu.memory_space<vmem>>, %arg1: memref<1376x256xf32, #tpu.memory_space<vmem>>, %arg2: memref<2x128xf32, #tpu.memory_space<vmem>>) attributes {dimension_semantics = [], scalar_prefetch = 0 : i64, scratch_operands = 0 : i64, tpu.core_type = #tpu.core_type<tc>} {
    %c0 = arith.constant 0 : index
    %c0_0 = arith.constant 0 : index
    %c0_1 = arith.constant 0 : index
    %0 = vector.load %arg0[%c0, %c0_0, %c0_1] : memref<2x8x16xf32, #tpu.memory_space<vmem>>, vector<2x8x16xf32>
    %c472 = arith.constant 472 : index
    %c0_2 = arith.constant 0 : index
    %1 = vector.load %arg1[%c472, %c0_2] : memref<1376x256xf32, #tpu.memory_space<vmem>>, vector<8x1xf32>
    %c480 = arith.constant 480 : index
    %c0_3 = arith.constant 0 : index
    %2 = vector.load %arg1[%c480, %c0_3] : memref<1376x256xf32, #tpu.memory_space<vmem>>, vector<8x1xf32>
    %cst = arith.constant dense<0.000000e+00> : vector<2x16xf32>
    %3 = vector.multi_reduction <add>, %0, %cst [1] : vector<2x8x16xf32> to vector<2x16xf32>
    %4 = vector.shape_cast %3 : vector<2x16xf32> to vector<2x1x16xf32>
    %cst_4 = arith.constant 8.000000e+00 : f32
    %5 = vector.broadcast %cst_4 : f32 to vector<2x1x16xf32>
    %6 = arith.divf %4, %5 : vector<2x1x16xf32>
    %7 = vector.broadcast %6 : vector<2x1x16xf32> to vector<2x8x16xf32>
    %8 = arith.subf %0, %7 : vector<2x8x16xf32>
    %9 = arith.mulf %8, %8 : vector<2x8x16xf32>
    %cst_5 = arith.constant dense<0.000000e+00> : vector<2x16xf32>
    %10 = vector.multi_reduction <add>, %9, %cst_5 [1] : vector<2x8x16xf32> to vector<2x16xf32>
    %11 = vector.shape_cast %10 : vector<2x16xf32> to vector<2x1x16xf32>
    %cst_6 = arith.constant 8.000000e+00 : f32
    %12 = vector.broadcast %cst_6 : f32 to vector<2x1x16xf32>
    %13 = arith.divf %11, %12 : vector<2x1x16xf32>
    %14 = vector.broadcast %6 : vector<2x1x16xf32> to vector<2x8x16xf32>
    %15 = arith.subf %0, %14 : vector<2x8x16xf32>
    %cst_7 = arith.constant 9.99999974E-6 : f32
    %16 = vector.broadcast %cst_7 : f32 to vector<2x1x16xf32>
    %17 = arith.addf %13, %16 : vector<2x1x16xf32>
    %18 = math.rsqrt %17 : vector<2x1x16xf32>
    %19 = vector.broadcast %18 : vector<2x1x16xf32> to vector<2x8x16xf32>
    %20 = arith.mulf %15, %19 : vector<2x8x16xf32>
    %21 = vector.shape_cast %1 : vector<8x1xf32> to vector<1x8x1xf32>
    %22 = vector.broadcast %21 : vector<1x8x1xf32> to vector<2x8x16xf32>
    %23 = arith.mulf %20, %22 : vector<2x8x16xf32>
    %24 = vector.shape_cast %2 : vector<8x1xf32> to vector<1x8x1xf32>
    %25 = vector.broadcast %24 : vector<1x8x1xf32> to vector<2x8x16xf32>
    %26 = arith.addf %23, %25 : vector<2x8x16xf32>
    %27 = vector.shape_cast %26 : vector<2x8x16xf32> to vector<16x16xf32>
    %c0_8 = arith.constant 0 : index
    %c0_9 = arith.constant 0 : index
    %28 = vector.load %arg1[%c0_8, %c0_9] : memref<1376x256xf32, #tpu.memory_space<vmem>>, vector<16x256xf32>
    %cst_10 = arith.constant dense<0.000000e+00> : vector<16x256xf32>
    %29 = tpu.matmul %27, %28, %cst_10 {dimension_numbers = #tpu.dot_dimension_numbers<[1], [0], [0], [1], [0, 0, 1, 1], [], []>} : vector<16x16xf32>, vector<16x256xf32>, vector<16x256xf32> -> vector<16x256xf32>
    %c16 = arith.constant 16 : index
    %c0_11 = arith.constant 0 : index
    %30 = vector.load %arg1[%c16, %c0_11] : memref<1376x256xf32, #tpu.memory_space<vmem>>, vector<1x256xf32>
    %31 = vector.broadcast %30 : vector<1x256xf32> to vector<16x256xf32>
    %32 = arith.addf %29, %31 : vector<16x256xf32>
    %33 = math.tanh %32 : vector<16x256xf32>
    %c24 = arith.constant 24 : index
    %c0_12 = arith.constant 0 : index
    %34 = vector.load %arg1[%c24, %c0_12] : memref<1376x256xf32, #tpu.memory_space<vmem>>, vector<256x128xf32>
    %cst_13 = arith.constant dense<0.000000e+00> : vector<16x128xf32>
    %35 = tpu.matmul %33, %34, %cst_13 {dimension_numbers = #tpu.dot_dimension_numbers<[1], [0], [0], [1], [0, 0, 1, 1], [], []>} : vector<16x256xf32>, vector<256x128xf32>, vector<16x128xf32> -> vector<16x128xf32>
    %c280 = arith.constant 280 : index
    %c0_14 = arith.constant 0 : index
    %36 = vector.load %arg1[%c280, %c0_14] : memref<1376x256xf32, #tpu.memory_space<vmem>>, vector<1x128xf32>
    %37 = vector.broadcast %36 : vector<1x128xf32> to vector<16x128xf32>
    %38 = arith.addf %35, %37 : vector<16x128xf32>
    %39 = math.tanh %38 : vector<16x128xf32>
    %c288 = arith.constant 288 : index
    %c0_15 = arith.constant 0 : index
    %40 = vector.load %arg1[%c288, %c0_15] : memref<1376x256xf32, #tpu.memory_space<vmem>>, vector<128x16xf32>
    %cst_16 = arith.constant dense<0.000000e+00> : vector<16x16xf32>
    %41 = tpu.matmul %39, %40, %cst_16 {dimension_numbers = #tpu.dot_dimension_numbers<[1], [0], [0], [1], [0, 0, 1, 1], [], []>} : vector<16x128xf32>, vector<128x16xf32>, vector<16x16xf32> -> vector<16x16xf32>
    %c416 = arith.constant 416 : index
    %c0_17 = arith.constant 0 : index
    %42 = vector.load %arg1[%c416, %c0_17] : memref<1376x256xf32, #tpu.memory_space<vmem>>, vector<1x16xf32>
    %43 = vector.broadcast %42 : vector<1x16xf32> to vector<16x16xf32>
    %44 = arith.addf %41, %43 : vector<16x16xf32>
    %45 = vector.shape_cast %44 : vector<16x16xf32> to vector<2x8x16xf32>
    %46 = arith.addf %45, %0 : vector<2x8x16xf32>
    %cst_18 = arith.constant dense<0.000000e+00> : vector<2x16xf32>
    %47 = vector.multi_reduction <add>, %46, %cst_18 [1] : vector<2x8x16xf32> to vector<2x16xf32>
    %48 = vector.shape_cast %47 : vector<2x16xf32> to vector<2x1x16xf32>
    %cst_19 = arith.constant 8.000000e+00 : f32
    %49 = vector.broadcast %cst_19 : f32 to vector<2x1x16xf32>
    %50 = arith.divf %48, %49 : vector<2x1x16xf32>
    %51 = vector.broadcast %50 : vector<2x1x16xf32> to vector<2x8x16xf32>
    %52 = arith.subf %46, %51 : vector<2x8x16xf32>
    %53 = arith.mulf %52, %52 : vector<2x8x16xf32>
    %cst_20 = arith.constant dense<0.000000e+00> : vector<2x16xf32>
    %54 = vector.multi_reduction <add>, %53, %cst_20 [1] : vector<2x8x16xf32> to vector<2x16xf32>
    %55 = vector.shape_cast %54 : vector<2x16xf32> to vector<2x1x16xf32>
    %cst_21 = arith.constant 8.000000e+00 : f32
    %56 = vector.broadcast %cst_21 : f32 to vector<2x1x16xf32>
    %57 = arith.divf %55, %56 : vector<2x1x16xf32>
    %58 = vector.broadcast %50 : vector<2x1x16xf32> to vector<2x8x16xf32>
    %59 = arith.subf %46, %58 : vector<2x8x16xf32>
    %cst_22 = arith.constant 9.99999974E-6 : f32
    %60 = vector.broadcast %cst_22 : f32 to vector<2x1x16xf32>
    %61 = arith.addf %57, %60 : vector<2x1x16xf32>
    %62 = math.rsqrt %61 : vector<2x1x16xf32>
    %63 = vector.broadcast %62 : vector<2x1x16xf32> to vector<2x8x16xf32>
    %64 = arith.mulf %59, %63 : vector<2x8x16xf32>
    %65 = vector.shape_cast %1 : vector<8x1xf32> to vector<1x8x1xf32>
    %66 = vector.broadcast %65 : vector<1x8x1xf32> to vector<2x8x16xf32>
    %67 = arith.mulf %64, %66 : vector<2x8x16xf32>
    %68 = vector.shape_cast %2 : vector<8x1xf32> to vector<1x8x1xf32>
    %69 = vector.broadcast %68 : vector<1x8x1xf32> to vector<2x8x16xf32>
    %70 = arith.addf %67, %69 : vector<2x8x16xf32>
    %c424 = arith.constant 424 : index
    %c0_23 = arith.constant 0 : index
    %71 = vector.load %arg1[%c424, %c0_23] : memref<1376x256xf32, #tpu.memory_space<vmem>>, vector<2x8xf32>
    %c432 = arith.constant 432 : index
    %c0_24 = arith.constant 0 : index
    %72 = vector.load %arg1[%c432, %c0_24] : memref<1376x256xf32, #tpu.memory_space<vmem>>, vector<2x1xf32>
    %73 = vector.extract_strided_slice %70 {offsets = [0, 0, 0], sizes = [2, 1, 16], strides = [1, 1, 1]} : vector<2x8x16xf32> to vector<2x1x16xf32>
    %74 = vector.extract_strided_slice %71 {offsets = [0, 0], sizes = [2, 1], strides = [1, 1]} : vector<2x8xf32> to vector<2x1xf32>
    %75 = vector.shape_cast %74 : vector<2x1xf32> to vector<1x2x1xf32>
    %76 = vector.broadcast %73 : vector<2x1x16xf32> to vector<2x2x16xf32>
    %77 = vector.broadcast %75 : vector<1x2x1xf32> to vector<2x2x16xf32>
    %78 = arith.mulf %76, %77 : vector<2x2x16xf32>
    %79 = vector.extract_strided_slice %70 {offsets = [0, 1, 0], sizes = [2, 1, 16], strides = [1, 1, 1]} : vector<2x8x16xf32> to vector<2x1x16xf32>
    %80 = vector.extract_strided_slice %71 {offsets = [0, 1], sizes = [2, 1], strides = [1, 1]} : vector<2x8xf32> to vector<2x1xf32>
    %81 = vector.shape_cast %80 : vector<2x1xf32> to vector<1x2x1xf32>
    %82 = vector.broadcast %79 : vector<2x1x16xf32> to vector<2x2x16xf32>
    %83 = vector.broadcast %81 : vector<1x2x1xf32> to vector<2x2x16xf32>
    %84 = arith.mulf %82, %83 : vector<2x2x16xf32>
    %85 = arith.addf %78, %84 : vector<2x2x16xf32>
    %86 = vector.extract_strided_slice %70 {offsets = [0, 2, 0], sizes = [2, 1, 16], strides = [1, 1, 1]} : vector<2x8x16xf32> to vector<2x1x16xf32>
    %87 = vector.extract_strided_slice %71 {offsets = [0, 2], sizes = [2, 1], strides = [1, 1]} : vector<2x8xf32> to vector<2x1xf32>
    %88 = vector.shape_cast %87 : vector<2x1xf32> to vector<1x2x1xf32>
    %89 = vector.broadcast %86 : vector<2x1x16xf32> to vector<2x2x16xf32>
    %90 = vector.broadcast %88 : vector<1x2x1xf32> to vector<2x2x16xf32>
    %91 = arith.mulf %89, %90 : vector<2x2x16xf32>
    %92 = arith.addf %85, %91 : vector<2x2x16xf32>
    %93 = vector.extract_strided_slice %70 {offsets = [0, 3, 0], sizes = [2, 1, 16], strides = [1, 1, 1]} : vector<2x8x16xf32> to vector<2x1x16xf32>
    %94 = vector.extract_strided_slice %71 {offsets = [0, 3], sizes = [2, 1], strides = [1, 1]} : vector<2x8xf32> to vector<2x1xf32>
    %95 = vector.shape_cast %94 : vector<2x1xf32> to vector<1x2x1xf32>
    %96 = vector.broadcast %93 : vector<2x1x16xf32> to vector<2x2x16xf32>
    %97 = vector.broadcast %95 : vector<1x2x1xf32> to vector<2x2x16xf32>
    %98 = arith.mulf %96, %97 : vector<2x2x16xf32>
    %99 = arith.addf %92, %98 : vector<2x2x16xf32>
    %100 = vector.extract_strided_slice %70 {offsets = [0, 4, 0], sizes = [2, 1, 16], strides = [1, 1, 1]} : vector<2x8x16xf32> to vector<2x1x16xf32>
    %101 = vector.extract_strided_slice %71 {offsets = [0, 4], sizes = [2, 1], strides = [1, 1]} : vector<2x8xf32> to vector<2x1xf32>
    %102 = vector.shape_cast %101 : vector<2x1xf32> to vector<1x2x1xf32>
    %103 = vector.broadcast %100 : vector<2x1x16xf32> to vector<2x2x16xf32>
    %104 = vector.broadcast %102 : vector<1x2x1xf32> to vector<2x2x16xf32>
    %105 = arith.mulf %103, %104 : vector<2x2x16xf32>
    %106 = arith.addf %99, %105 : vector<2x2x16xf32>
    %107 = vector.extract_strided_slice %70 {offsets = [0, 5, 0], sizes = [2, 1, 16], strides = [1, 1, 1]} : vector<2x8x16xf32> to vector<2x1x16xf32>
    %108 = vector.extract_strided_slice %71 {offsets = [0, 5], sizes = [2, 1], strides = [1, 1]} : vector<2x8xf32> to vector<2x1xf32>
    %109 = vector.shape_cast %108 : vector<2x1xf32> to vector<1x2x1xf32>
    %110 = vector.broadcast %107 : vector<2x1x16xf32> to vector<2x2x16xf32>
    %111 = vector.broadcast %109 : vector<1x2x1xf32> to vector<2x2x16xf32>
    %112 = arith.mulf %110, %111 : vector<2x2x16xf32>
    %113 = arith.addf %106, %112 : vector<2x2x16xf32>
    %114 = vector.extract_strided_slice %70 {offsets = [0, 6, 0], sizes = [2, 1, 16], strides = [1, 1, 1]} : vector<2x8x16xf32> to vector<2x1x16xf32>
    %115 = vector.extract_strided_slice %71 {offsets = [0, 6], sizes = [2, 1], strides = [1, 1]} : vector<2x8xf32> to vector<2x1xf32>
    %116 = vector.shape_cast %115 : vector<2x1xf32> to vector<1x2x1xf32>
    %117 = vector.broadcast %114 : vector<2x1x16xf32> to vector<2x2x16xf32>
    %118 = vector.broadcast %116 : vector<1x2x1xf32> to vector<2x2x16xf32>
    %119 = arith.mulf %117, %118 : vector<2x2x16xf32>
    %120 = arith.addf %113, %119 : vector<2x2x16xf32>
    %121 = vector.extract_strided_slice %70 {offsets = [0, 7, 0], sizes = [2, 1, 16], strides = [1, 1, 1]} : vector<2x8x16xf32> to vector<2x1x16xf32>
    %122 = vector.extract_strided_slice %71 {offsets = [0, 7], sizes = [2, 1], strides = [1, 1]} : vector<2x8xf32> to vector<2x1xf32>
    %123 = vector.shape_cast %122 : vector<2x1xf32> to vector<1x2x1xf32>
    %124 = vector.broadcast %121 : vector<2x1x16xf32> to vector<2x2x16xf32>
    %125 = vector.broadcast %123 : vector<1x2x1xf32> to vector<2x2x16xf32>
    %126 = arith.mulf %124, %125 : vector<2x2x16xf32>
    %127 = arith.addf %120, %126 : vector<2x2x16xf32>
    %128 = vector.shape_cast %72 : vector<2x1xf32> to vector<1x2x1xf32>
    %129 = vector.broadcast %128 : vector<1x2x1xf32> to vector<2x2x16xf32>
    %130 = arith.addf %127, %129 : vector<2x2x16xf32>
    %131 = math.tanh %130 : vector<2x2x16xf32>
    %c440 = arith.constant 440 : index
    %c0_25 = arith.constant 0 : index
    %132 = vector.load %arg1[%c440, %c0_25] : memref<1376x256xf32, #tpu.memory_space<vmem>>, vector<7x2xf32>
    %c448 = arith.constant 448 : index
    %c0_26 = arith.constant 0 : index
    %133 = vector.load %arg1[%c448, %c0_26] : memref<1376x256xf32, #tpu.memory_space<vmem>>, vector<7x1xf32>
    %134 = vector.extract_strided_slice %131 {offsets = [0, 0, 0], sizes = [2, 1, 16], strides = [1, 1, 1]} : vector<2x2x16xf32> to vector<2x1x16xf32>
    %135 = vector.extract_strided_slice %132 {offsets = [0, 0], sizes = [7, 1], strides = [1, 1]} : vector<7x2xf32> to vector<7x1xf32>
    %136 = vector.shape_cast %135 : vector<7x1xf32> to vector<1x7x1xf32>
    %137 = vector.broadcast %134 : vector<2x1x16xf32> to vector<2x7x16xf32>
    %138 = vector.broadcast %136 : vector<1x7x1xf32> to vector<2x7x16xf32>
    %139 = arith.mulf %137, %138 : vector<2x7x16xf32>
    %140 = vector.extract_strided_slice %131 {offsets = [0, 1, 0], sizes = [2, 1, 16], strides = [1, 1, 1]} : vector<2x2x16xf32> to vector<2x1x16xf32>
    %141 = vector.extract_strided_slice %132 {offsets = [0, 1], sizes = [7, 1], strides = [1, 1]} : vector<7x2xf32> to vector<7x1xf32>
    %142 = vector.shape_cast %141 : vector<7x1xf32> to vector<1x7x1xf32>
    %143 = vector.broadcast %140 : vector<2x1x16xf32> to vector<2x7x16xf32>
    %144 = vector.broadcast %142 : vector<1x7x1xf32> to vector<2x7x16xf32>
    %145 = arith.mulf %143, %144 : vector<2x7x16xf32>
    %146 = arith.addf %139, %145 : vector<2x7x16xf32>
    %147 = vector.shape_cast %133 : vector<7x1xf32> to vector<1x7x1xf32>
    %148 = vector.broadcast %147 : vector<1x7x1xf32> to vector<2x7x16xf32>
    %149 = arith.addf %146, %148 : vector<2x7x16xf32>
    %150 = math.tanh %149 : vector<2x7x16xf32>
    %c456 = arith.constant 456 : index
    %c0_27 = arith.constant 0 : index
    %151 = vector.load %arg1[%c456, %c0_27] : memref<1376x256xf32, #tpu.memory_space<vmem>>, vector<8x7xf32>
    %c464 = arith.constant 464 : index
    %c0_28 = arith.constant 0 : index
    %152 = vector.load %arg1[%c464, %c0_28] : memref<1376x256xf32, #tpu.memory_space<vmem>>, vector<8x1xf32>
    %153 = vector.extract_strided_slice %150 {offsets = [0, 0, 0], sizes = [2, 1, 16], strides = [1, 1, 1]} : vector<2x7x16xf32> to vector<2x1x16xf32>
    %154 = vector.extract_strided_slice %151 {offsets = [0, 0], sizes = [8, 1], strides = [1, 1]} : vector<8x7xf32> to vector<8x1xf32>
    %155 = vector.shape_cast %154 : vector<8x1xf32> to vector<1x8x1xf32>
    %156 = vector.broadcast %153 : vector<2x1x16xf32> to vector<2x8x16xf32>
    %157 = vector.broadcast %155 : vector<1x8x1xf32> to vector<2x8x16xf32>
    %158 = arith.mulf %156, %157 : vector<2x8x16xf32>
    %159 = vector.extract_strided_slice %150 {offsets = [0, 1, 0], sizes = [2, 1, 16], strides = [1, 1, 1]} : vector<2x7x16xf32> to vector<2x1x16xf32>
    %160 = vector.extract_strided_slice %151 {offsets = [0, 1], sizes = [8, 1], strides = [1, 1]} : vector<8x7xf32> to vector<8x1xf32>
    %161 = vector.shape_cast %160 : vector<8x1xf32> to vector<1x8x1xf32>
    %162 = vector.broadcast %159 : vector<2x1x16xf32> to vector<2x8x16xf32>
    %163 = vector.broadcast %161 : vector<1x8x1xf32> to vector<2x8x16xf32>
    %164 = arith.mulf %162, %163 : vector<2x8x16xf32>
    %165 = arith.addf %158, %164 : vector<2x8x16xf32>
    %166 = vector.extract_strided_slice %150 {offsets = [0, 2, 0], sizes = [2, 1, 16], strides = [1, 1, 1]} : vector<2x7x16xf32> to vector<2x1x16xf32>
    %167 = vector.extract_strided_slice %151 {offsets = [0, 2], sizes = [8, 1], strides = [1, 1]} : vector<8x7xf32> to vector<8x1xf32>
    %168 = vector.shape_cast %167 : vector<8x1xf32> to vector<1x8x1xf32>
    %169 = vector.broadcast %166 : vector<2x1x16xf32> to vector<2x8x16xf32>
    %170 = vector.broadcast %168 : vector<1x8x1xf32> to vector<2x8x16xf32>
    %171 = arith.mulf %169, %170 : vector<2x8x16xf32>
    %172 = arith.addf %165, %171 : vector<2x8x16xf32>
    %173 = vector.extract_strided_slice %150 {offsets = [0, 3, 0], sizes = [2, 1, 16], strides = [1, 1, 1]} : vector<2x7x16xf32> to vector<2x1x16xf32>
    %174 = vector.extract_strided_slice %151 {offsets = [0, 3], sizes = [8, 1], strides = [1, 1]} : vector<8x7xf32> to vector<8x1xf32>
    %175 = vector.shape_cast %174 : vector<8x1xf32> to vector<1x8x1xf32>
    %176 = vector.broadcast %173 : vector<2x1x16xf32> to vector<2x8x16xf32>
    %177 = vector.broadcast %175 : vector<1x8x1xf32> to vector<2x8x16xf32>
    %178 = arith.mulf %176, %177 : vector<2x8x16xf32>
    %179 = arith.addf %172, %178 : vector<2x8x16xf32>
    %180 = vector.extract_strided_slice %150 {offsets = [0, 4, 0], sizes = [2, 1, 16], strides = [1, 1, 1]} : vector<2x7x16xf32> to vector<2x1x16xf32>
    %181 = vector.extract_strided_slice %151 {offsets = [0, 4], sizes = [8, 1], strides = [1, 1]} : vector<8x7xf32> to vector<8x1xf32>
    %182 = vector.shape_cast %181 : vector<8x1xf32> to vector<1x8x1xf32>
    %183 = vector.broadcast %180 : vector<2x1x16xf32> to vector<2x8x16xf32>
    %184 = vector.broadcast %182 : vector<1x8x1xf32> to vector<2x8x16xf32>
    %185 = arith.mulf %183, %184 : vector<2x8x16xf32>
    %186 = arith.addf %179, %185 : vector<2x8x16xf32>
    %187 = vector.extract_strided_slice %150 {offsets = [0, 5, 0], sizes = [2, 1, 16], strides = [1, 1, 1]} : vector<2x7x16xf32> to vector<2x1x16xf32>
    %188 = vector.extract_strided_slice %151 {offsets = [0, 5], sizes = [8, 1], strides = [1, 1]} : vector<8x7xf32> to vector<8x1xf32>
    %189 = vector.shape_cast %188 : vector<8x1xf32> to vector<1x8x1xf32>
    %190 = vector.broadcast %187 : vector<2x1x16xf32> to vector<2x8x16xf32>
    %191 = vector.broadcast %189 : vector<1x8x1xf32> to vector<2x8x16xf32>
    %192 = arith.mulf %190, %191 : vector<2x8x16xf32>
    %193 = arith.addf %186, %192 : vector<2x8x16xf32>
    %194 = vector.extract_strided_slice %150 {offsets = [0, 6, 0], sizes = [2, 1, 16], strides = [1, 1, 1]} : vector<2x7x16xf32> to vector<2x1x16xf32>
    %195 = vector.extract_strided_slice %151 {offsets = [0, 6], sizes = [8, 1], strides = [1, 1]} : vector<8x7xf32> to vector<8x1xf32>
    %196 = vector.shape_cast %195 : vector<8x1xf32> to vector<1x8x1xf32>
    %197 = vector.broadcast %194 : vector<2x1x16xf32> to vector<2x8x16xf32>
    %198 = vector.broadcast %196 : vector<1x8x1xf32> to vector<2x8x16xf32>
    %199 = arith.mulf %197, %198 : vector<2x8x16xf32>
    %200 = arith.addf %193, %199 : vector<2x8x16xf32>
    %201 = vector.shape_cast %152 : vector<8x1xf32> to vector<1x8x1xf32>
    %202 = vector.broadcast %201 : vector<1x8x1xf32> to vector<2x8x16xf32>
    %203 = arith.addf %200, %202 : vector<2x8x16xf32>
    %204 = arith.addf %46, %203 : vector<2x8x16xf32>
    %c960 = arith.constant 960 : index
    %c0_29 = arith.constant 0 : index
    %205 = vector.load %arg1[%c960, %c0_29] : memref<1376x256xf32, #tpu.memory_space<vmem>>, vector<8x1xf32>
    %c968 = arith.constant 968 : index
    %c0_30 = arith.constant 0 : index
    %206 = vector.load %arg1[%c968, %c0_30] : memref<1376x256xf32, #tpu.memory_space<vmem>>, vector<8x1xf32>
    %cst_31 = arith.constant dense<0.000000e+00> : vector<2x16xf32>
    %207 = vector.multi_reduction <add>, %204, %cst_31 [1] : vector<2x8x16xf32> to vector<2x16xf32>
    %208 = vector.shape_cast %207 : vector<2x16xf32> to vector<2x1x16xf32>
    %cst_32 = arith.constant 8.000000e+00 : f32
    %209 = vector.broadcast %cst_32 : f32 to vector<2x1x16xf32>
    %210 = arith.divf %208, %209 : vector<2x1x16xf32>
    %211 = vector.broadcast %210 : vector<2x1x16xf32> to vector<2x8x16xf32>
    %212 = arith.subf %204, %211 : vector<2x8x16xf32>
    %213 = arith.mulf %212, %212 : vector<2x8x16xf32>
    %cst_33 = arith.constant dense<0.000000e+00> : vector<2x16xf32>
    %214 = vector.multi_reduction <add>, %213, %cst_33 [1] : vector<2x8x16xf32> to vector<2x16xf32>
    %215 = vector.shape_cast %214 : vector<2x16xf32> to vector<2x1x16xf32>
    %cst_34 = arith.constant 8.000000e+00 : f32
    %216 = vector.broadcast %cst_34 : f32 to vector<2x1x16xf32>
    %217 = arith.divf %215, %216 : vector<2x1x16xf32>
    %218 = vector.broadcast %210 : vector<2x1x16xf32> to vector<2x8x16xf32>
    %219 = arith.subf %204, %218 : vector<2x8x16xf32>
    %cst_35 = arith.constant 9.99999974E-6 : f32
    %220 = vector.broadcast %cst_35 : f32 to vector<2x1x16xf32>
    %221 = arith.addf %217, %220 : vector<2x1x16xf32>
    %222 = math.rsqrt %221 : vector<2x1x16xf32>
    %223 = vector.broadcast %222 : vector<2x1x16xf32> to vector<2x8x16xf32>
    %224 = arith.mulf %219, %223 : vector<2x8x16xf32>
    %225 = vector.shape_cast %205 : vector<8x1xf32> to vector<1x8x1xf32>
    %226 = vector.broadcast %225 : vector<1x8x1xf32> to vector<2x8x16xf32>
    %227 = arith.mulf %224, %226 : vector<2x8x16xf32>
    %228 = vector.shape_cast %206 : vector<8x1xf32> to vector<1x8x1xf32>
    %229 = vector.broadcast %228 : vector<1x8x1xf32> to vector<2x8x16xf32>
    %230 = arith.addf %227, %229 : vector<2x8x16xf32>
    %231 = vector.shape_cast %230 : vector<2x8x16xf32> to vector<16x16xf32>
    %c488 = arith.constant 488 : index
    %c0_36 = arith.constant 0 : index
    %232 = vector.load %arg1[%c488, %c0_36] : memref<1376x256xf32, #tpu.memory_space<vmem>>, vector<16x256xf32>
    %cst_37 = arith.constant dense<0.000000e+00> : vector<16x256xf32>
    %233 = tpu.matmul %231, %232, %cst_37 {dimension_numbers = #tpu.dot_dimension_numbers<[1], [0], [0], [1], [0, 0, 1, 1], [], []>} : vector<16x16xf32>, vector<16x256xf32>, vector<16x256xf32> -> vector<16x256xf32>
    %c504 = arith.constant 504 : index
    %c0_38 = arith.constant 0 : index
    %234 = vector.load %arg1[%c504, %c0_38] : memref<1376x256xf32, #tpu.memory_space<vmem>>, vector<1x256xf32>
    %235 = vector.broadcast %234 : vector<1x256xf32> to vector<16x256xf32>
    %236 = arith.addf %233, %235 : vector<16x256xf32>
    %237 = math.tanh %236 : vector<16x256xf32>
    %c512 = arith.constant 512 : index
    %c0_39 = arith.constant 0 : index
    %238 = vector.load %arg1[%c512, %c0_39] : memref<1376x256xf32, #tpu.memory_space<vmem>>, vector<256x128xf32>
    %cst_40 = arith.constant dense<0.000000e+00> : vector<16x128xf32>
    %239 = tpu.matmul %237, %238, %cst_40 {dimension_numbers = #tpu.dot_dimension_numbers<[1], [0], [0], [1], [0, 0, 1, 1], [], []>} : vector<16x256xf32>, vector<256x128xf32>, vector<16x128xf32> -> vector<16x128xf32>
    %c768 = arith.constant 768 : index
    %c0_41 = arith.constant 0 : index
    %240 = vector.load %arg1[%c768, %c0_41] : memref<1376x256xf32, #tpu.memory_space<vmem>>, vector<1x128xf32>
    %241 = vector.broadcast %240 : vector<1x128xf32> to vector<16x128xf32>
    %242 = arith.addf %239, %241 : vector<16x128xf32>
    %243 = math.tanh %242 : vector<16x128xf32>
    %c776 = arith.constant 776 : index
    %c0_42 = arith.constant 0 : index
    %244 = vector.load %arg1[%c776, %c0_42] : memref<1376x256xf32, #tpu.memory_space<vmem>>, vector<128x16xf32>
    %cst_43 = arith.constant dense<0.000000e+00> : vector<16x16xf32>
    %245 = tpu.matmul %243, %244, %cst_43 {dimension_numbers = #tpu.dot_dimension_numbers<[1], [0], [0], [1], [0, 0, 1, 1], [], []>} : vector<16x128xf32>, vector<128x16xf32>, vector<16x16xf32> -> vector<16x16xf32>
    %c904 = arith.constant 904 : index
    %c0_44 = arith.constant 0 : index
    %246 = vector.load %arg1[%c904, %c0_44] : memref<1376x256xf32, #tpu.memory_space<vmem>>, vector<1x16xf32>
    %247 = vector.broadcast %246 : vector<1x16xf32> to vector<16x16xf32>
    %248 = arith.addf %245, %247 : vector<16x16xf32>
    %249 = vector.shape_cast %248 : vector<16x16xf32> to vector<2x8x16xf32>
    %250 = arith.addf %249, %204 : vector<2x8x16xf32>
    %cst_45 = arith.constant dense<0.000000e+00> : vector<2x16xf32>
    %251 = vector.multi_reduction <add>, %250, %cst_45 [1] : vector<2x8x16xf32> to vector<2x16xf32>
    %252 = vector.shape_cast %251 : vector<2x16xf32> to vector<2x1x16xf32>
    %cst_46 = arith.constant 8.000000e+00 : f32
    %253 = vector.broadcast %cst_46 : f32 to vector<2x1x16xf32>
    %254 = arith.divf %252, %253 : vector<2x1x16xf32>
    %255 = vector.broadcast %254 : vector<2x1x16xf32> to vector<2x8x16xf32>
    %256 = arith.subf %250, %255 : vector<2x8x16xf32>
    %257 = arith.mulf %256, %256 : vector<2x8x16xf32>
    %cst_47 = arith.constant dense<0.000000e+00> : vector<2x16xf32>
    %258 = vector.multi_reduction <add>, %257, %cst_47 [1] : vector<2x8x16xf32> to vector<2x16xf32>
    %259 = vector.shape_cast %258 : vector<2x16xf32> to vector<2x1x16xf32>
    %cst_48 = arith.constant 8.000000e+00 : f32
    %260 = vector.broadcast %cst_48 : f32 to vector<2x1x16xf32>
    %261 = arith.divf %259, %260 : vector<2x1x16xf32>
    %262 = vector.broadcast %254 : vector<2x1x16xf32> to vector<2x8x16xf32>
    %263 = arith.subf %250, %262 : vector<2x8x16xf32>
    %cst_49 = arith.constant 9.99999974E-6 : f32
    %264 = vector.broadcast %cst_49 : f32 to vector<2x1x16xf32>
    %265 = arith.addf %261, %264 : vector<2x1x16xf32>
    %266 = math.rsqrt %265 : vector<2x1x16xf32>
    %267 = vector.broadcast %266 : vector<2x1x16xf32> to vector<2x8x16xf32>
    %268 = arith.mulf %263, %267 : vector<2x8x16xf32>
    %269 = vector.shape_cast %205 : vector<8x1xf32> to vector<1x8x1xf32>
    %270 = vector.broadcast %269 : vector<1x8x1xf32> to vector<2x8x16xf32>
    %271 = arith.mulf %268, %270 : vector<2x8x16xf32>
    %272 = vector.shape_cast %206 : vector<8x1xf32> to vector<1x8x1xf32>
    %273 = vector.broadcast %272 : vector<1x8x1xf32> to vector<2x8x16xf32>
    %274 = arith.addf %271, %273 : vector<2x8x16xf32>
    %c912 = arith.constant 912 : index
    %c0_50 = arith.constant 0 : index
    %275 = vector.load %arg1[%c912, %c0_50] : memref<1376x256xf32, #tpu.memory_space<vmem>>, vector<2x8xf32>
    %c920 = arith.constant 920 : index
    %c0_51 = arith.constant 0 : index
    %276 = vector.load %arg1[%c920, %c0_51] : memref<1376x256xf32, #tpu.memory_space<vmem>>, vector<2x1xf32>
    %277 = vector.extract_strided_slice %274 {offsets = [0, 0, 0], sizes = [2, 1, 16], strides = [1, 1, 1]} : vector<2x8x16xf32> to vector<2x1x16xf32>
    %278 = vector.extract_strided_slice %275 {offsets = [0, 0], sizes = [2, 1], strides = [1, 1]} : vector<2x8xf32> to vector<2x1xf32>
    %279 = vector.shape_cast %278 : vector<2x1xf32> to vector<1x2x1xf32>
    %280 = vector.broadcast %277 : vector<2x1x16xf32> to vector<2x2x16xf32>
    %281 = vector.broadcast %279 : vector<1x2x1xf32> to vector<2x2x16xf32>
    %282 = arith.mulf %280, %281 : vector<2x2x16xf32>
    %283 = vector.extract_strided_slice %274 {offsets = [0, 1, 0], sizes = [2, 1, 16], strides = [1, 1, 1]} : vector<2x8x16xf32> to vector<2x1x16xf32>
    %284 = vector.extract_strided_slice %275 {offsets = [0, 1], sizes = [2, 1], strides = [1, 1]} : vector<2x8xf32> to vector<2x1xf32>
    %285 = vector.shape_cast %284 : vector<2x1xf32> to vector<1x2x1xf32>
    %286 = vector.broadcast %283 : vector<2x1x16xf32> to vector<2x2x16xf32>
    %287 = vector.broadcast %285 : vector<1x2x1xf32> to vector<2x2x16xf32>
    %288 = arith.mulf %286, %287 : vector<2x2x16xf32>
    %289 = arith.addf %282, %288 : vector<2x2x16xf32>
    %290 = vector.extract_strided_slice %274 {offsets = [0, 2, 0], sizes = [2, 1, 16], strides = [1, 1, 1]} : vector<2x8x16xf32> to vector<2x1x16xf32>
    %291 = vector.extract_strided_slice %275 {offsets = [0, 2], sizes = [2, 1], strides = [1, 1]} : vector<2x8xf32> to vector<2x1xf32>
    %292 = vector.shape_cast %291 : vector<2x1xf32> to vector<1x2x1xf32>
    %293 = vector.broadcast %290 : vector<2x1x16xf32> to vector<2x2x16xf32>
    %294 = vector.broadcast %292 : vector<1x2x1xf32> to vector<2x2x16xf32>
    %295 = arith.mulf %293, %294 : vector<2x2x16xf32>
    %296 = arith.addf %289, %295 : vector<2x2x16xf32>
    %297 = vector.extract_strided_slice %274 {offsets = [0, 3, 0], sizes = [2, 1, 16], strides = [1, 1, 1]} : vector<2x8x16xf32> to vector<2x1x16xf32>
    %298 = vector.extract_strided_slice %275 {offsets = [0, 3], sizes = [2, 1], strides = [1, 1]} : vector<2x8xf32> to vector<2x1xf32>
    %299 = vector.shape_cast %298 : vector<2x1xf32> to vector<1x2x1xf32>
    %300 = vector.broadcast %297 : vector<2x1x16xf32> to vector<2x2x16xf32>
    %301 = vector.broadcast %299 : vector<1x2x1xf32> to vector<2x2x16xf32>
    %302 = arith.mulf %300, %301 : vector<2x2x16xf32>
    %303 = arith.addf %296, %302 : vector<2x2x16xf32>
    %304 = vector.extract_strided_slice %274 {offsets = [0, 4, 0], sizes = [2, 1, 16], strides = [1, 1, 1]} : vector<2x8x16xf32> to vector<2x1x16xf32>
    %305 = vector.extract_strided_slice %275 {offsets = [0, 4], sizes = [2, 1], strides = [1, 1]} : vector<2x8xf32> to vector<2x1xf32>
    %306 = vector.shape_cast %305 : vector<2x1xf32> to vector<1x2x1xf32>
    %307 = vector.broadcast %304 : vector<2x1x16xf32> to vector<2x2x16xf32>
    %308 = vector.broadcast %306 : vector<1x2x1xf32> to vector<2x2x16xf32>
    %309 = arith.mulf %307, %308 : vector<2x2x16xf32>
    %310 = arith.addf %303, %309 : vector<2x2x16xf32>
    %311 = vector.extract_strided_slice %274 {offsets = [0, 5, 0], sizes = [2, 1, 16], strides = [1, 1, 1]} : vector<2x8x16xf32> to vector<2x1x16xf32>
    %312 = vector.extract_strided_slice %275 {offsets = [0, 5], sizes = [2, 1], strides = [1, 1]} : vector<2x8xf32> to vector<2x1xf32>
    %313 = vector.shape_cast %312 : vector<2x1xf32> to vector<1x2x1xf32>
    %314 = vector.broadcast %311 : vector<2x1x16xf32> to vector<2x2x16xf32>
    %315 = vector.broadcast %313 : vector<1x2x1xf32> to vector<2x2x16xf32>
    %316 = arith.mulf %314, %315 : vector<2x2x16xf32>
    %317 = arith.addf %310, %316 : vector<2x2x16xf32>
    %318 = vector.extract_strided_slice %274 {offsets = [0, 6, 0], sizes = [2, 1, 16], strides = [1, 1, 1]} : vector<2x8x16xf32> to vector<2x1x16xf32>
    %319 = vector.extract_strided_slice %275 {offsets = [0, 6], sizes = [2, 1], strides = [1, 1]} : vector<2x8xf32> to vector<2x1xf32>
    %320 = vector.shape_cast %319 : vector<2x1xf32> to vector<1x2x1xf32>
    %321 = vector.broadcast %318 : vector<2x1x16xf32> to vector<2x2x16xf32>
    %322 = vector.broadcast %320 : vector<1x2x1xf32> to vector<2x2x16xf32>
    %323 = arith.mulf %321, %322 : vector<2x2x16xf32>
    %324 = arith.addf %317, %323 : vector<2x2x16xf32>
    %325 = vector.extract_strided_slice %274 {offsets = [0, 7, 0], sizes = [2, 1, 16], strides = [1, 1, 1]} : vector<2x8x16xf32> to vector<2x1x16xf32>
    %326 = vector.extract_strided_slice %275 {offsets = [0, 7], sizes = [2, 1], strides = [1, 1]} : vector<2x8xf32> to vector<2x1xf32>
    %327 = vector.shape_cast %326 : vector<2x1xf32> to vector<1x2x1xf32>
    %328 = vector.broadcast %325 : vector<2x1x16xf32> to vector<2x2x16xf32>
    %329 = vector.broadcast %327 : vector<1x2x1xf32> to vector<2x2x16xf32>
    %330 = arith.mulf %328, %329 : vector<2x2x16xf32>
    %331 = arith.addf %324, %330 : vector<2x2x16xf32>
    %332 = vector.shape_cast %276 : vector<2x1xf32> to vector<1x2x1xf32>
    %333 = vector.broadcast %332 : vector<1x2x1xf32> to vector<2x2x16xf32>
    %334 = arith.addf %331, %333 : vector<2x2x16xf32>
    %335 = math.tanh %334 : vector<2x2x16xf32>
    %c928 = arith.constant 928 : index
    %c0_52 = arith.constant 0 : index
    %336 = vector.load %arg1[%c928, %c0_52] : memref<1376x256xf32, #tpu.memory_space<vmem>>, vector<7x2xf32>
    %c936 = arith.constant 936 : index
    %c0_53 = arith.constant 0 : index
    %337 = vector.load %arg1[%c936, %c0_53] : memref<1376x256xf32, #tpu.memory_space<vmem>>, vector<7x1xf32>
    %338 = vector.extract_strided_slice %335 {offsets = [0, 0, 0], sizes = [2, 1, 16], strides = [1, 1, 1]} : vector<2x2x16xf32> to vector<2x1x16xf32>
    %339 = vector.extract_strided_slice %336 {offsets = [0, 0], sizes = [7, 1], strides = [1, 1]} : vector<7x2xf32> to vector<7x1xf32>
    %340 = vector.shape_cast %339 : vector<7x1xf32> to vector<1x7x1xf32>
    %341 = vector.broadcast %338 : vector<2x1x16xf32> to vector<2x7x16xf32>
    %342 = vector.broadcast %340 : vector<1x7x1xf32> to vector<2x7x16xf32>
    %343 = arith.mulf %341, %342 : vector<2x7x16xf32>
    %344 = vector.extract_strided_slice %335 {offsets = [0, 1, 0], sizes = [2, 1, 16], strides = [1, 1, 1]} : vector<2x2x16xf32> to vector<2x1x16xf32>
    %345 = vector.extract_strided_slice %336 {offsets = [0, 1], sizes = [7, 1], strides = [1, 1]} : vector<7x2xf32> to vector<7x1xf32>
    %346 = vector.shape_cast %345 : vector<7x1xf32> to vector<1x7x1xf32>
    %347 = vector.broadcast %344 : vector<2x1x16xf32> to vector<2x7x16xf32>
    %348 = vector.broadcast %346 : vector<1x7x1xf32> to vector<2x7x16xf32>
    %349 = arith.mulf %347, %348 : vector<2x7x16xf32>
    %350 = arith.addf %343, %349 : vector<2x7x16xf32>
    %351 = vector.shape_cast %337 : vector<7x1xf32> to vector<1x7x1xf32>
    %352 = vector.broadcast %351 : vector<1x7x1xf32> to vector<2x7x16xf32>
    %353 = arith.addf %350, %352 : vector<2x7x16xf32>
    %354 = math.tanh %353 : vector<2x7x16xf32>
    %c944 = arith.constant 944 : index
    %c0_54 = arith.constant 0 : index
    %355 = vector.load %arg1[%c944, %c0_54] : memref<1376x256xf32, #tpu.memory_space<vmem>>, vector<8x7xf32>
    %c952 = arith.constant 952 : index
    %c0_55 = arith.constant 0 : index
    %356 = vector.load %arg1[%c952, %c0_55] : memref<1376x256xf32, #tpu.memory_space<vmem>>, vector<8x1xf32>
    %357 = vector.extract_strided_slice %354 {offsets = [0, 0, 0], sizes = [2, 1, 16], strides = [1, 1, 1]} : vector<2x7x16xf32> to vector<2x1x16xf32>
    %358 = vector.extract_strided_slice %355 {offsets = [0, 0], sizes = [8, 1], strides = [1, 1]} : vector<8x7xf32> to vector<8x1xf32>
    %359 = vector.shape_cast %358 : vector<8x1xf32> to vector<1x8x1xf32>
    %360 = vector.broadcast %357 : vector<2x1x16xf32> to vector<2x8x16xf32>
    %361 = vector.broadcast %359 : vector<1x8x1xf32> to vector<2x8x16xf32>
    %362 = arith.mulf %360, %361 : vector<2x8x16xf32>
    %363 = vector.extract_strided_slice %354 {offsets = [0, 1, 0], sizes = [2, 1, 16], strides = [1, 1, 1]} : vector<2x7x16xf32> to vector<2x1x16xf32>
    %364 = vector.extract_strided_slice %355 {offsets = [0, 1], sizes = [8, 1], strides = [1, 1]} : vector<8x7xf32> to vector<8x1xf32>
    %365 = vector.shape_cast %364 : vector<8x1xf32> to vector<1x8x1xf32>
    %366 = vector.broadcast %363 : vector<2x1x16xf32> to vector<2x8x16xf32>
    %367 = vector.broadcast %365 : vector<1x8x1xf32> to vector<2x8x16xf32>
    %368 = arith.mulf %366, %367 : vector<2x8x16xf32>
    %369 = arith.addf %362, %368 : vector<2x8x16xf32>
    %370 = vector.extract_strided_slice %354 {offsets = [0, 2, 0], sizes = [2, 1, 16], strides = [1, 1, 1]} : vector<2x7x16xf32> to vector<2x1x16xf32>
    %371 = vector.extract_strided_slice %355 {offsets = [0, 2], sizes = [8, 1], strides = [1, 1]} : vector<8x7xf32> to vector<8x1xf32>
    %372 = vector.shape_cast %371 : vector<8x1xf32> to vector<1x8x1xf32>
    %373 = vector.broadcast %370 : vector<2x1x16xf32> to vector<2x8x16xf32>
    %374 = vector.broadcast %372 : vector<1x8x1xf32> to vector<2x8x16xf32>
    %375 = arith.mulf %373, %374 : vector<2x8x16xf32>
    %376 = arith.addf %369, %375 : vector<2x8x16xf32>
    %377 = vector.extract_strided_slice %354 {offsets = [0, 3, 0], sizes = [2, 1, 16], strides = [1, 1, 1]} : vector<2x7x16xf32> to vector<2x1x16xf32>
    %378 = vector.extract_strided_slice %355 {offsets = [0, 3], sizes = [8, 1], strides = [1, 1]} : vector<8x7xf32> to vector<8x1xf32>
    %379 = vector.shape_cast %378 : vector<8x1xf32> to vector<1x8x1xf32>
    %380 = vector.broadcast %377 : vector<2x1x16xf32> to vector<2x8x16xf32>
    %381 = vector.broadcast %379 : vector<1x8x1xf32> to vector<2x8x16xf32>
    %382 = arith.mulf %380, %381 : vector<2x8x16xf32>
    %383 = arith.addf %376, %382 : vector<2x8x16xf32>
    %384 = vector.extract_strided_slice %354 {offsets = [0, 4, 0], sizes = [2, 1, 16], strides = [1, 1, 1]} : vector<2x7x16xf32> to vector<2x1x16xf32>
    %385 = vector.extract_strided_slice %355 {offsets = [0, 4], sizes = [8, 1], strides = [1, 1]} : vector<8x7xf32> to vector<8x1xf32>
    %386 = vector.shape_cast %385 : vector<8x1xf32> to vector<1x8x1xf32>
    %387 = vector.broadcast %384 : vector<2x1x16xf32> to vector<2x8x16xf32>
    %388 = vector.broadcast %386 : vector<1x8x1xf32> to vector<2x8x16xf32>
    %389 = arith.mulf %387, %388 : vector<2x8x16xf32>
    %390 = arith.addf %383, %389 : vector<2x8x16xf32>
    %391 = vector.extract_strided_slice %354 {offsets = [0, 5, 0], sizes = [2, 1, 16], strides = [1, 1, 1]} : vector<2x7x16xf32> to vector<2x1x16xf32>
    %392 = vector.extract_strided_slice %355 {offsets = [0, 5], sizes = [8, 1], strides = [1, 1]} : vector<8x7xf32> to vector<8x1xf32>
    %393 = vector.shape_cast %392 : vector<8x1xf32> to vector<1x8x1xf32>
    %394 = vector.broadcast %391 : vector<2x1x16xf32> to vector<2x8x16xf32>
    %395 = vector.broadcast %393 : vector<1x8x1xf32> to vector<2x8x16xf32>
    %396 = arith.mulf %394, %395 : vector<2x8x16xf32>
    %397 = arith.addf %390, %396 : vector<2x8x16xf32>
    %398 = vector.extract_strided_slice %354 {offsets = [0, 6, 0], sizes = [2, 1, 16], strides = [1, 1, 1]} : vector<2x7x16xf32> to vector<2x1x16xf32>
    %399 = vector.extract_strided_slice %355 {offsets = [0, 6], sizes = [8, 1], strides = [1, 1]} : vector<8x7xf32> to vector<8x1xf32>
    %400 = vector.shape_cast %399 : vector<8x1xf32> to vector<1x8x1xf32>
    %401 = vector.broadcast %398 : vector<2x1x16xf32> to vector<2x8x16xf32>
    %402 = vector.broadcast %400 : vector<1x8x1xf32> to vector<2x8x16xf32>
    %403 = arith.mulf %401, %402 : vector<2x8x16xf32>
    %404 = arith.addf %397, %403 : vector<2x8x16xf32>
    %405 = vector.shape_cast %356 : vector<8x1xf32> to vector<1x8x1xf32>
    %406 = vector.broadcast %405 : vector<1x8x1xf32> to vector<2x8x16xf32>
    %407 = arith.addf %404, %406 : vector<2x8x16xf32>
    %408 = arith.addf %250, %407 : vector<2x8x16xf32>
    %409 = vector.shape_cast %408 : vector<2x8x16xf32> to vector<2x128xf32>
    %410 = vector.shape_cast %0 : vector<2x8x16xf32> to vector<2x128xf32>
    %411 = tpu.concatenate %410, %409 in 1 : vector<2x128xf32>, vector<2x128xf32> -> vector<2x256xf32>
    %c976 = arith.constant 976 : index
    %c0_56 = arith.constant 0 : index
    %412 = vector.load %arg1[%c976, %c0_56] : memref<1376x256xf32, #tpu.memory_space<vmem>>, vector<256x128xf32>
    %cst_57 = arith.constant dense<0.000000e+00> : vector<2x128xf32>
    %413 = tpu.matmul %411, %412, %cst_57 {dimension_numbers = #tpu.dot_dimension_numbers<[1], [0], [0], [1], [0, 0, 1, 1], [], []>} : vector<2x256xf32>, vector<256x128xf32>, vector<2x128xf32> -> vector<2x128xf32>
    %c1232 = arith.constant 1232 : index
    %c0_58 = arith.constant 0 : index
    %414 = vector.load %arg1[%c1232, %c0_58] : memref<1376x256xf32, #tpu.memory_space<vmem>>, vector<1x128xf32>
    %415 = vector.broadcast %414 : vector<1x128xf32> to vector<2x128xf32>
    %416 = arith.addf %413, %415 : vector<2x128xf32>
    %417 = math.tanh %416 : vector<2x128xf32>
    %c1240 = arith.constant 1240 : index
    %c0_59 = arith.constant 0 : index
    %418 = vector.load %arg1[%c1240, %c0_59] : memref<1376x256xf32, #tpu.memory_space<vmem>>, vector<128x128xf32>
    %cst_60 = arith.constant dense<0.000000e+00> : vector<2x128xf32>
    %419 = tpu.matmul %417, %418, %cst_60 {dimension_numbers = #tpu.dot_dimension_numbers<[1], [0], [0], [1], [0, 0, 1, 1], [], []>} : vector<2x128xf32>, vector<128x128xf32>, vector<2x128xf32> -> vector<2x128xf32>
    %c1368 = arith.constant 1368 : index
    %c0_61 = arith.constant 0 : index
    %420 = vector.load %arg1[%c1368, %c0_61] : memref<1376x256xf32, #tpu.memory_space<vmem>>, vector<1x128xf32>
    %421 = vector.broadcast %420 : vector<1x128xf32> to vector<2x128xf32>
    %422 = arith.addf %419, %421 : vector<2x128xf32>
    %c0_62 = arith.constant 0 : index
    %c0_63 = arith.constant 0 : index
    %423 = vector.load %arg2[%c0_62, %c0_63] : memref<2x128xf32, #tpu.memory_space<vmem>>, vector<2x128xf32>
    tpu.vector_store %arg2[%c0_62, %c0_63], %422 {strides = array<i32>} : memref<2x128xf32, #tpu.memory_space<vmem>>, vector<2x128xf32>,
    return
  }
}

</mosaic_0001>

<llo_original>
// kernel: tpu_custom_call.1
$region0: #{tpu_custom_call.1}
  #allocation0 [shape = 'u32[]', space=smem, size = 0x4, offset = 0x4, fixed_abs, tag = 'smem constant byte address 0x4 - core index']
  #allocation1 [shape = 'u32[144,128]{1,0:T(1,128)}', space=vmem, size = 0x12000, scoped, tag = 'internal scratch']
  %s0 = inlined_call_operand.hbm [shape: f32[2,8,16], index: 0, kind: input, shape index: {}]
  %s1 = inlined_call_operand.hbm [shape: f32[1376,256], index: 1, kind: input, shape index: {}]
  %s2 = inlined_call_operand.hbm [shape: f32[2,128], index: 2, kind: output, shape index: {}]
  %s3 = sld [smem:[#allocation0]]
  $region26: #{tpu_custom_call.1} parent=0
    _
  %s5 = ssub.s32 1, %s3
  %s6 = scalar_select 0, %s5, %s3
  $region1: #{tpu_custom_call.1} parent=0
    #allocation2 [shape = 'u8[8192]{0}', space=vmem, size = 0x2000, scoped, tag = 'input window, operand 0, single buffered']
    #allocation3 [shape = 's32[1]{0}', space=sflag, size = 0x4, scoped, tag = 'scoped memory for tpu_custom_call.1']
    #allocation4 [shape = 's32[1]{0}', space=sflag, size = 0x4, scoped, tag = 'scoped memory for tpu_custom_call.1']
    #allocation5 [shape = 'u8[1409024]{0}', space=vmem, size = 0x158000, scoped, tag = 'input window, operand 1, single buffered']
    #allocation6 [shape = 's32[1]{0}', space=sflag, size = 0x4, scoped, tag = 'scoped memory for tpu_custom_call.1']
    #allocation7 [shape = 'u8[1024]{0}', space=vmem, size = 0x400, scoped, tag = 'output window, operand 0, single buffered']
    %7 = vsyncpa [#allocation3], 0
    %8 = vsyncpa [#allocation6], 0
    %9 = vsyncpa [#allocation4], 0
    // Predicated region
    $region2: #{tpu_custom_call.1} parent=1 // pred_check
      _
    $region3: #{tpu_custom_call.1} parent=1 // pred_check_branch
      %11 = sbr.rel (0) target = $region5
    $region4: #{tpu_custom_call.1} parent=1 // pred_region
      %s13 = ssub.s32 256, 256
      %14 = vsyncadd [#allocation3], %s13
      %s15 = sshll.u32 [#allocation2], 4
      %s16 = int_to_ptr.vmem [resolvable:$true] %s15
      %21 = dma.hbm_to_vmem [thread:$0]  %s0, 256, %s16, [#allocation3], 128, 128, 8
    $region5: #{tpu_custom_call.1} parent=1 // pred_fallthru
      _
    // Predicated region
    $region6: #{tpu_custom_call.1} parent=1 // pred_check
      _
    $region7: #{tpu_custom_call.1} parent=1 // pred_check_branch
      %23 = sbr.rel (0) target = $region9
    $region8: #{tpu_custom_call.1} parent=1 // pred_region
      %s25 = ssub.s32 44032, 44032
      %26 = vsyncadd [#allocation6], %s25
      %s27 = sshll.u32 [#allocation5], 4
      %s28 = int_to_ptr.vmem [resolvable:$true] %s27
      %33 = dma.hbm_to_vmem [thread:$0]  %s1, 44032, %s28, [#allocation6], 256, 256, 16
    $region9: #{tpu_custom_call.1} parent=1 // pred_fallthru
      _
    // Predicated region
    $region10: #{tpu_custom_call.1} parent=1 // pred_check
      _
    $region11: #{tpu_custom_call.1} parent=1 // pred_check_branch
      %35 = sbr.rel (0) target = $region13
    $region12: #{tpu_custom_call.1} parent=1 // pred_region
      %36 = dma.done [#allocation3], 256
    $region13: #{tpu_custom_call.1} parent=1 // pred_fallthru
      _
    // Predicated region
    $region14: #{tpu_custom_call.1} parent=1 // pred_check
      _
    $region15: #{tpu_custom_call.1} parent=1 // pred_check_branch
      %38 = sbr.rel (0) target = $region17
    $region16: #{tpu_custom_call.1} parent=1 // pred_region
      %39 = dma.done [#allocation6], 44032
    $region17: #{tpu_custom_call.1} parent=1 // pred_fallthru
      _
    %v40 = vld [vmem:[#allocation2] sm:$0xff]
    %v41 = vld [vmem:[#allocation2 + $0x8] sm:$0xff]
    %v42 = vld [vmem:[#allocation5 + $0x3b0] sm:$0xff]
    %v43 = vld [vmem:[#allocation5 + $0x3c0] sm:$0xff]
    %vm44 = vcmask 130048
    %v45 = vsel %vm44, %v40, 0.0
    %v46 = vrot.slane %v45, 4
    %v47 = vadd.f32 %v45, %v46
    %v48 = vrot.slane %v47, 2
    %v49 = vadd.f32 %v47, %v48
    %v50 = vrot.slane %v49, 1
    %v51 = vadd.f32 %v49, %v50
    %v52 = vsel %vm44, %v41, 0.0
    %v53 = vrot.slane %v52, 4
    %v54 = vadd.f32 %v52, %v53
    %v55 = vrot.slane %v54, 2
    %v56 = vadd.f32 %v54, %v55
    %v57 = vrot.slane %v56, 1
    %v58 = vadd.f32 %v56, %v57
    %v59 = vrcp.pop 8.0
    %v60 = vmul.f32 %v51, %v59
    %v61 = vmul.f32 %v58, %v59
    %v62 = vsub.f32 %v40, %v60
    %v63 = vsub.f32 %v41, %v61
    %v64 = vmul.f32 %v62, %v62
    %v65 = vmul.f32 %v63, %v63
    %v66 = vsel %vm44, %v64, 0.0
    %v67 = vrot.slane %v66, 4
    %v68 = vadd.f32 %v66, %v67
    %v69 = vrot.slane %v68, 2
    %v70 = vadd.f32 %v68, %v69
    %v71 = vrot.slane %v70, 1
    %v72 = vadd.f32 %v70, %v71
    %v73 = vsel %vm44, %v65, 0.0
    %v74 = vrot.slane %v73, 4
    %v75 = vadd.f32 %v73, %v74
    %v76 = vrot.slane %v75, 2
    %v77 = vadd.f32 %v75, %v76
    %v78 = vrot.slane %v77, 1
    %v79 = vadd.f32 %v77, %v78
    %v80 = vmul.f32 %v72, %v59
    %v81 = vmul.f32 %v79, %v59
    %v82 = vadd.f32 %v80, 1e-05
    %v83 = vadd.f32 %v81, 1e-05
    %v84 = vrsqrt.pop %v82
    %v85 = vrsqrt.pop %v83
    %v86 = vmul.f32 %v62, %v84
    %v87 = vmul.f32 %v63, %v85
    %89 = vset.pattern.permute.xlu0 0
    %90 = vperm.xlu0 %89, %v42
    %v91 = vpop.permute.xlu0 %90
    %v93 = vmul.f32 %v86, %v91
    %v94 = vmul.f32 %v87, %v91
    %96 = vset.pattern.permute.xlu0 0
    %97 = vperm.xlu0 %96, %v43
    %v98 = vpop.permute.xlu0 %97
    %v100 = vadd.f32 %v93, %v98
    %v101 = vadd.f32 %v94, %v98
    %v102 = vld [vmem:[#allocation5] sm:$0xff]
    %v103 = vld [vmem:[#allocation5 + $0x8] sm:$0xff]
    %v104 = vld [vmem:[#allocation5 + $0x10] sm:$0xff]
    %v105 = vld [vmem:[#allocation5 + $0x18] sm:$0xff]
    %s106 = scalar_lea.vmem [#allocation5], 32
    %v107 = vld [vmem:[%s106] ss:$8 sm:$0x3]
    %v109 = vlaneseq
    %v110 = vshrl.u32 %v109, 7
    %v111 = vsub.s32 0, %v110
    %v112 = vrot.slane %v107, %v111
    %v113 = vlaneseq
    %v114 = vshrl.u32 %v113, 7
    %v115 = vsub.s32 1, %v114
    %v116 = vrot.slane %v107, %v115
    %v120 = vsel %vm44, %v100, 0
    %v123 = vsel %vm44, %v101, 0
    %125 = vmatprep.subr.mxu0 %v103
    %126 = vmatpush1.msra.mxu0 %v102
    %127 = vmatprep.subr.mxu0 %v105
    %128 = vmatpush1.msra.mxu0 %v104
    %129 = vmatprep.subr.mxu0 0.0
    %130 = vmatpush1.msra.mxu0 0.0
    %131 = vmatprep.subr.mxu0 0.0
    %132 = vmatpush1.msra.mxu0 0.0
    %133 = vmatprep.subr.mxu0 0.0
    %134 = vmatpush1.msra.mxu0 0.0
    %135 = vmatprep.subr.mxu0 0.0
    %136 = vmatpush1.msra.mxu0 0.0
    %137 = vmatprep.subr.mxu0 0.0
    %138 = vmatpush1.msra.mxu0 0.0
    %139 = vmatprep.subr.mxu0 0.0
    %140 = vmatpush1.msra.mxu0 0.0
    %141 = vmatprep.subr.mxu0 0.0
    %142 = vmatpush1.msra.mxu0 0.0
    %143 = vmatprep.subr.mxu0 0.0
    %144 = vmatpush1.msra.mxu0 0.0
    %145 = vmatprep.subr.mxu0 0.0
    %146 = vmatpush1.msra.mxu0 0.0
    %147 = vmatprep.subr.mxu0 0.0
    %148 = vmatpush1.msra.mxu0 0.0
    %149 = vmatprep.subr.mxu0 0.0
    %150 = vmatpush1.msra.mxu0 0.0
    %151 = vmatprep.subr.mxu0 0.0
    %152 = vmatpush1.msra.mxu0 0.0
    %153 = vmatprep.subr.mxu0 0.0
    %154 = vmatpush1.msra.mxu0 0.0
    %155 = vmatprep.subr.mxu0 0.0
    %156 = vmatpush1.msra.mxu0 0.0
    %157 = vmatprep.subr.mxu0 0.0
    %158 = vmatpush1.msra.mxu0 0.0
    %159 = vmatprep.subr.mxu0 0.0
    %160 = vmatpush1.msra.mxu0 0.0
    %161 = vmatprep.subr.mxu0 0.0
    %162 = vmatpush1.msra.mxu0 0.0
    %163 = vmatprep.subr.mxu0 0.0
    %164 = vmatpush1.msra.mxu0 0.0
    %165 = vmatprep.subr.mxu0 0.0
    %166 = vmatpush1.msra.mxu0 0.0
    %167 = vmatprep.subr.mxu0 0.0
    %168 = vmatpush1.msra.mxu0 0.0
    %169 = vmatprep.subr.mxu0 0.0
    %170 = vmatpush1.msra.mxu0 0.0
    %171 = vmatprep.subr.mxu0 0.0
    %172 = vmatpush1.msra.mxu0 0.0
    %173 = vmatprep.subr.mxu0 0.0
    %174 = vmatpush1.msra.mxu0 0.0
    %175 = vmatprep.subr.mxu0 0.0
    %176 = vmatpush1.msra.mxu0 0.0
    %177 = vmatprep.subr.mxu0 0.0
    %178 = vmatpush1.msra.mxu0 0.0
    %179 = vmatprep.subr.mxu0 0.0
    %180 = vmatpush1.msra.mxu0 0.0
    %181 = vmatprep.subr.mxu0 0.0
    %182 = vmatpush1.msra.mxu0 0.0
    %183 = vmatprep.subr.mxu0 0.0
    %184 = vmatpush1.msra.mxu0 0.0
    %185 = vmatprep.subr.mxu0 0.0
    %186 = vmatpush1.msra.mxu0 0.0
    %187 = vmatprep.subr.mxu0 0.0
    %188 = vmatpush1.msra.mxu0 0.0
    %189 = vmatprep.mubr.f32.mxu0 0.0
    %190 = vmatmul.mubr.f32.gmra.mrb[0].mxu0 %v120
    %v191 = vpop.f32.mrb[0].mxu0
    %v192 = vadd.f32 %v112, %v191
    %v193 = vpop.f32.mrb[0].mxu0
    %v194 = vadd.f32 %v116, %v193
    %195 = vmatprep.mubr.f32.mxu0 0.0
    %196 = vmatmul.mubr.f32.gmra.mrb[0].mxu0 %v123
    %v197 = vpop.f32.mrb[0].mxu0
    %v198 = vadd.f32 %v112, %v197
    %v199 = vpop.f32.mrb[0].mxu0
    %v200 = vadd.f32 %v116, %v199
    %201 = vdwg.mxu0
    %v202 = vtanh.pop %v192
    %v203 = vtanh.pop %v194
    %v204 = vtanh.pop %v198
    %v205 = vtanh.pop %v200
    %v206 = vld [vmem:[#allocation5 + $0x30] sm:$0xff]
    %v207 = vld [vmem:[#allocation5 + $0x40] sm:$0xff]
    %v208 = vld [vmem:[#allocation5 + $0x50] sm:$0xff]
    %v209 = vld [vmem:[#allocation5 + $0x60] sm:$0xff]
    %v210 = vld [vmem:[#allocation5 + $0x70] sm:$0xff]
    %v211 = vld [vmem:[#allocation5 + $0x80] sm:$0xff]
    %v212 = vld [vmem:[#allocation5 + $0x90] sm:$0xff]
    %v213 = vld [vmem:[#allocation5 + $0xa0] sm:$0xff]
    %v214 = vld [vmem:[#allocation5 + $0xb0] sm:$0xff]
    %v215 = vld [vmem:[#allocation5 + $0xc0] sm:$0xff]
    %v216 = vld [vmem:[#allocation5 + $0xd0] sm:$0xff]
    %v217 = vld [vmem:[#allocation5 + $0xe0] sm:$0xff]
    %v218 = vld [vmem:[#allocation5 + $0xf0] sm:$0xff]
    %v219 = vld [vmem:[#allocation5 + $0x100] sm:$0xff]
    %v220 = vld [vmem:[#allocation5 + $0x110] sm:$0xff]
    %v221 = vld [vmem:[#allocation5 + $0x120] sm:$0xff]
    %v222 = vld [vmem:[#allocation5 + $0x130] sm:$0xff]
    %v223 = vld [vmem:[#allocation5 + $0x140] sm:$0xff]
    %v224 = vld [vmem:[#allocation5 + $0x150] sm:$0xff]
    %v225 = vld [vmem:[#allocation5 + $0x160] sm:$0xff]
    %v226 = vld [vmem:[#allocation5 + $0x170] sm:$0xff]
    %v227 = vld [vmem:[#allocation5 + $0x180] sm:$0xff]
    %v228 = vld [vmem:[#allocation5 + $0x190] sm:$0xff]
    %v229 = vld [vmem:[#allocation5 + $0x1a0] sm:$0xff]
    %v230 = vld [vmem:[#allocation5 + $0x1b0] sm:$0xff]
    %v231 = vld [vmem:[#allocation5 + $0x1c0] sm:$0xff]
    %v232 = vld [vmem:[#allocation5 + $0x1d0] sm:$0xff]
    %v233 = vld [vmem:[#allocation5 + $0x1e0] sm:$0xff]
    %v234 = vld [vmem:[#allocation5 + $0x1f0] sm:$0xff]
    %v235 = vld [vmem:[#allocation5 + $0x200] sm:$0xff]
    %v236 = vld [vmem:[#allocation5 + $0x210] sm:$0xff]
    %v237 = vld [vmem:[#allocation5 + $0x220] sm:$0xff]
    %v238 = vld [vmem:[#allocation5 + $0x230] ss:$0 sm:$0xff]
    %239 = vmatprep.subr.mxu0 0.0
    %240 = vmatpush1.msra.mxu0 %v206
    %241 = vmatprep.subr.mxu0 0.0
    %242 = vmatpush1.msra.mxu0 %v207
    %243 = vmatprep.subr.mxu0 0.0
    %244 = vmatpush1.msra.mxu0 %v208
    %245 = vmatprep.subr.mxu0 0.0
    %246 = vmatpush1.msra.mxu0 %v209
    %247 = vmatprep.subr.mxu0 0.0
    %248 = vmatpush1.msra.mxu0 %v210
    %249 = vmatprep.subr.mxu0 0.0
    %250 = vmatpush1.msra.mxu0 %v211
    %251 = vmatprep.subr.mxu0 0.0
    %252 = vmatpush1.msra.mxu0 %v212
    %253 = vmatprep.subr.mxu0 0.0
    %254 = vmatpush1.msra.mxu0 %v213
    %255 = vmatprep.subr.mxu0 0.0
    %256 = vmatpush1.msra.mxu0 %v214
    %257 = vmatprep.subr.mxu0 0.0
    %258 = vmatpush1.msra.mxu0 %v215
    %259 = vmatprep.subr.mxu0 0.0
    %260 = vmatpush1.msra.mxu0 %v216
    %261 = vmatprep.subr.mxu0 0.0
    %262 = vmatpush1.msra.mxu0 %v217
    %263 = vmatprep.subr.mxu0 0.0
    %264 = vmatpush1.msra.mxu0 %v218
    %265 = vmatprep.subr.mxu0 0.0
    %266 = vmatpush1.msra.mxu0 %v219
    %267 = vmatprep.subr.mxu0 0.0
    %268 = vmatpush1.msra.mxu0 %v220
    %269 = vmatprep.subr.mxu0 0.0
    %270 = vmatpush1.msra.mxu0 %v221
    %271 = vmatprep.subr.mxu0 0.0
    %272 = vmatpush1.msra.mxu0 %v222
    %273 = vmatprep.subr.mxu0 0.0
    %274 = vmatpush1.msra.mxu0 %v223
    %275 = vmatprep.subr.mxu0 0.0
    %276 = vmatpush1.msra.mxu0 %v224
    %277 = vmatprep.subr.mxu0 0.0
    %278 = vmatpush1.msra.mxu0 %v225
    %279 = vmatprep.subr.mxu0 0.0
    %280 = vmatpush1.msra.mxu0 %v226
    %281 = vmatprep.subr.mxu0 0.0
    %282 = vmatpush1.msra.mxu0 %v227
    %283 = vmatprep.subr.mxu0 0.0
    %284 = vmatpush1.msra.mxu0 %v228
    %285 = vmatprep.subr.mxu0 0.0
    %286 = vmatpush1.msra.mxu0 %v229
    %287 = vmatprep.subr.mxu0 0.0
    %288 = vmatpush1.msra.mxu0 %v230
    %289 = vmatprep.subr.mxu0 0.0
    %290 = vmatpush1.msra.mxu0 %v231
    %291 = vmatprep.subr.mxu0 0.0
    %292 = vmatpush1.msra.mxu0 %v232
    %293 = vmatprep.subr.mxu0 0.0
    %294 = vmatpush1.msra.mxu0 %v233
    %295 = vmatprep.subr.mxu0 0.0
    %296 = vmatpush1.msra.mxu0 %v234
    %297 = vmatprep.subr.mxu0 0.0
    %298 = vmatpush1.msra.mxu0 %v235
    %299 = vmatprep.subr.mxu0 0.0
    %300 = vmatpush1.msra.mxu0 %v236
    %301 = vmatprep.subr.mxu0 0.0
    %302 = vmatpush1.msra.mxu0 %v237
    %303 = vmatprep.mubr.f32.mxu0 %v203
    %304 = vmatmul.mubr.f32.gmra.mrb[0].mxu0 %v202
    %v305 = vpop.f32.mrb[0].mxu0
    %v306 = vadd.f32 %v238, %v305
    %v307 = vpop.f32.mrb[0].mxu0
    %308 = vmatprep.mubr.f32.mxu0 %v205
    %309 = vmatmul.mubr.f32.gmra.mrb[0].mxu0 %v204
    %v310 = vpop.f32.mrb[0].mxu0
    %v311 = vadd.f32 %v238, %v310
    %v312 = vpop.f32.mrb[0].mxu0
    %313 = vdwg.mxu0
    %v314 = vtanh.pop %v306
    %v315 = vtanh.pop %v311
    %v316 = vld [vmem:[#allocation5 + $0x240] sm:$0xff]
    %v317 = vld [vmem:[#allocation5 + $0x250] sm:$0xff]
    %v318 = vld [vmem:[#allocation5 + $0x260] sm:$0xff]
    %v319 = vld [vmem:[#allocation5 + $0x270] sm:$0xff]
    %v320 = vld [vmem:[#allocation5 + $0x280] sm:$0xff]
    %v321 = vld [vmem:[#allocation5 + $0x290] sm:$0xff]
    %v322 = vld [vmem:[#allocation5 + $0x2a0] sm:$0xff]
    %v323 = vld [vmem:[#allocation5 + $0x2b0] sm:$0xff]
    %v324 = vld [vmem:[#allocation5 + $0x2c0] sm:$0xff]
    %v325 = vld [vmem:[#allocation5 + $0x2d0] sm:$0xff]
    %v326 = vld [vmem:[#allocation5 + $0x2e0] sm:$0xff]
    %v327 = vld [vmem:[#allocation5 + $0x2f0] sm:$0xff]
    %v328 = vld [vmem:[#allocation5 + $0x300] sm:$0xff]
    %v329 = vld [vmem:[#allocation5 + $0x310] sm:$0xff]
    %v330 = vld [vmem:[#allocation5 + $0x320] sm:$0xff]
    %v331 = vld [vmem:[#allocation5 + $0x330] sm:$0xff]
    %v332 = vld [vmem:[#allocation5 + $0x340] ss:$0 sm:$0xff]
    %333 = vmatprep.subr.mxu0 0.0
    %334 = vmatpush1.msra.mxu0 %v316
    %335 = vmatprep.subr.mxu0 0.0
    %336 = vmatpush1.msra.mxu0 %v317
    %337 = vmatprep.subr.mxu0 0.0
    %338 = vmatpush1.msra.mxu0 %v318
    %339 = vmatprep.subr.mxu0 0.0
    %340 = vmatpush1.msra.mxu0 %v319
    %341 = vmatprep.subr.mxu0 0.0
    %342 = vmatpush1.msra.mxu0 %v320
    %343 = vmatprep.subr.mxu0 0.0
    %344 = vmatpush1.msra.mxu0 %v321
    %345 = vmatprep.subr.mxu0 0.0
    %346 = vmatpush1.msra.mxu0 %v322
    %347 = vmatprep.subr.mxu0 0.0
    %348 = vmatpush1.msra.mxu0 %v323
    %349 = vmatprep.subr.mxu0 0.0
    %350 = vmatpush1.msra.mxu0 %v324
    %351 = vmatprep.subr.mxu0 0.0
    %352 = vmatpush1.msra.mxu0 %v325
    %353 = vmatprep.subr.mxu0 0.0
    %354 = vmatpush1.msra.mxu0 %v326
    %355 = vmatprep.subr.mxu0 0.0
    %356 = vmatpush1.msra.mxu0 %v327
    %357 = vmatprep.subr.mxu0 0.0
    %358 = vmatpush1.msra.mxu0 %v328
    %359 = vmatprep.subr.mxu0 0.0
    %360 = vmatpush1.msra.mxu0 %v329
    %361 = vmatprep.subr.mxu0 0.0
    %362 = vmatpush1.msra.mxu0 %v330
    %363 = vmatprep.subr.mxu0 0.0
    %364 = vmatpush1.msra.mxu0 %v331
    %365 = vmatprep.subr.mxu0 0.0
    %366 = vmatpush1.msra.mxu0 0.0
    %367 = vmatprep.subr.mxu0 0.0
    %368 = vmatpush1.msra.mxu0 0.0
    %369 = vmatprep.subr.mxu0 0.0
    %370 = vmatpush1.msra.mxu0 0.0
    %371 = vmatprep.subr.mxu0 0.0
    %372 = vmatpush1.msra.mxu0 0.0
    %373 = vmatprep.subr.mxu0 0.0
    %374 = vmatpush1.msra.mxu0 0.0
    %375 = vmatprep.subr.mxu0 0.0
    %376 = vmatpush1.msra.mxu0 0.0
    %377 = vmatprep.subr.mxu0 0.0
    %378 = vmatpush1.msra.mxu0 0.0
    %379 = vmatprep.subr.mxu0 0.0
    %380 = vmatpush1.msra.mxu0 0.0
    %381 = vmatprep.subr.mxu0 0.0
    %382 = vmatpush1.msra.mxu0 0.0
    %383 = vmatprep.subr.mxu0 0.0
    %384 = vmatpush1.msra.mxu0 0.0
    %385 = vmatprep.subr.mxu0 0.0
    %386 = vmatpush1.msra.mxu0 0.0
    %387 = vmatprep.subr.mxu0 0.0
    %388 = vmatpush1.msra.mxu0 0.0
    %389 = vmatprep.subr.mxu0 0.0
    %390 = vmatpush1.msra.mxu0 0.0
    %391 = vmatprep.subr.mxu0 0.0
    %392 = vmatpush1.msra.mxu0 0.0
    %393 = vmatprep.subr.mxu0 0.0
    %394 = vmatpush1.msra.mxu0 0.0
    %395 = vmatprep.subr.mxu0 0.0
    %396 = vmatpush1.msra.mxu0 0.0
    %397 = vmatprep.mubr.f32.mxu0 0.0
    %398 = vmatmul.mubr.f32.gmra.mrb[0].mxu0 %v314
    %v399 = vpop.f32.mrb[0].mxu0
    %v400 = vadd.f32 %v332, %v399
    %v401 = vpop.f32.mrb[0].mxu0
    %402 = vmatprep.mubr.f32.mxu0 0.0
    %403 = vmatmul.mubr.f32.gmra.mrb[0].mxu0 %v315
    %v404 = vpop.f32.mrb[0].mxu0
    %v405 = vadd.f32 %v332, %v404
    %v406 = vpop.f32.mrb[0].mxu0
    %407 = vdwg.mxu0
    %v408 = vadd.f32 %v400, %v40
    %v409 = vadd.f32 %v405, %v41
    %v410 = vsel %vm44, %v408, 0.0
    %v411 = vrot.slane %v410, 4
    %v412 = vadd.f32 %v410, %v411
    %v413 = vrot.slane %v412, 2
    %v414 = vadd.f32 %v412, %v413
    %v415 = vrot.slane %v414, 1
    %v416 = vadd.f32 %v414, %v415
    %v417 = vsel %vm44, %v409, 0.0
    %v418 = vrot.slane %v417, 4
    %v419 = vadd.f32 %v417, %v418
    %v420 = vrot.slane %v419, 2
    %v421 = vadd.f32 %v419, %v420
    %v422 = vrot.slane %v421, 1
    %v423 = vadd.f32 %v421, %v422
    %v424 = vmul.f32 %v416, %v59
    %v425 = vmul.f32 %v423, %v59
    %v426 = vsub.f32 %v408, %v424
    %v427 = vsub.f32 %v409, %v425
    %v428 = vmul.f32 %v426, %v426
    %v429 = vmul.f32 %v427, %v427
    %v430 = vsel %vm44, %v428, 0.0
    %v431 = vrot.slane %v430, 4
    %v432 = vadd.f32 %v430, %v431
    %v433 = vrot.slane %v432, 2
    %v434 = vadd.f32 %v432, %v433
    %v435 = vrot.slane %v434, 1
    %v436 = vadd.f32 %v434, %v435
    %v437 = vsel %vm44, %v429, 0.0
    %v438 = vrot.slane %v437, 4
    %v439 = vadd.f32 %v437, %v438
    %v440 = vrot.slane %v439, 2
    %v441 = vadd.f32 %v439, %v440
    %v442 = vrot.slane %v441, 1
    %v443 = vadd.f32 %v441, %v442
    %v444 = vmul.f32 %v436, %v59
    %v445 = vmul.f32 %v443, %v59
    %v446 = vadd.f32 %v444, 1e-05
    %v447 = vadd.f32 %v445, 1e-05
    %v448 = vrsqrt.pop %v446
    %v449 = vrsqrt.pop %v447
    %v450 = vmul.f32 %v426, %v448
    %v451 = vmul.f32 %v427, %v449
    %v452 = vmul.f32 %v450, %v91
    %v453 = vmul.f32 %v451, %v91
    %v454 = vadd.f32 %v452, %v98
    %v455 = vadd.f32 %v453, %v98
    %v456 = vld [vmem:[#allocation5 + $0x350] sm:$0x3]
    %v457 = vld [vmem:[#allocation5 + $0x360] sm:$0x3]
    %v458 = vlaneseq
    %v459 = vshrl.u32 %v458, 7
    %v460 = vsub.s32 0, %v459
    %v461 = vrot.slane %v454, %v460
    %v462 = vlaneseq
    %v463 = vshrl.u32 %v462, 7
    %v464 = vsub.s32 0, %v463
    %v465 = vrot.slane %v455, %v464
    %467 = vset.pattern.permute.xlu0 0
    %468 = vperm.xlu0 %467, %v456
    %v469 = vpop.permute.xlu0 %468
    %v471 = vmul.f32 %v461, %v469
    %v472 = vmul.f32 %v465, %v469
    %v473 = vlaneseq
    %v474 = vshrl.u32 %v473, 7
    %v475 = vsub.s32 1, %v474
    %v476 = vrot.slane %v454, %v475
    %v477 = vlaneseq
    %v478 = vshrl.u32 %v477, 7
    %v479 = vsub.s32 1, %v478
    %v480 = vrot.slane %v455, %v479
    %481 = vset.pattern.permute.xlu0 1
    %482 = vperm.xlu0 %481, %v456
    %v483 = vpop.permute.xlu0 %482
    %v485 = vmul.f32 %v476, %v483
    %v486 = vmul.f32 %v480, %v483
    %v487 = vadd.f32 %v471, %v485
    %v488 = vadd.f32 %v472, %v486
    %v489 = vlaneseq
    %v490 = vshrl.u32 %v489, 7
    %v491 = vsub.s32 2, %v490
    %v492 = vrot.slane %v454, %v491
    %v493 = vlaneseq
    %v494 = vshrl.u32 %v493, 7
    %v495 = vsub.s32 2, %v494
    %v496 = vrot.slane %v455, %v495
    %497 = vset.pattern.permute.xlu0 2
    %498 = vperm.xlu0 %497, %v456
    %v499 = vpop.permute.xlu0 %498
    %v501 = vmul.f32 %v492, %v499
    %v502 = vmul.f32 %v496, %v499
    %v503 = vadd.f32 %v487, %v501
    %v504 = vadd.f32 %v488, %v502
    %v505 = vlaneseq
    %v506 = vshrl.u32 %v505, 7
    %v507 = vsub.s32 3, %v506
    %v508 = vrot.slane %v454, %v507
    %v509 = vlaneseq
    %v510 = vshrl.u32 %v509, 7
    %v511 = vsub.s32 3, %v510
    %v512 = vrot.slane %v455, %v511
    %513 = vset.pattern.permute.xlu0 3
    %514 = vperm.xlu0 %513, %v456
    %v515 = vpop.permute.xlu0 %514
    %v517 = vmul.f32 %v508, %v515
    %v518 = vmul.f32 %v512, %v515
    %v519 = vadd.f32 %v503, %v517
    %v520 = vadd.f32 %v504, %v518
    %v521 = vlaneseq
    %v522 = vshrl.u32 %v521, 7
    %v523 = vsub.s32 4, %v522
    %v524 = vrot.slane %v454, %v523
    %v525 = vlaneseq
    %v526 = vshrl.u32 %v525, 7
    %v527 = vsub.s32 4, %v526
    %v528 = vrot.slane %v455, %v527
    %529 = vset.pattern.permute.xlu0 4
    %530 = vperm.xlu0 %529, %v456
    %v531 = vpop.permute.xlu0 %530
    %v533 = vmul.f32 %v524, %v531
    %v534 = vmul.f32 %v528, %v531
    %v535 = vadd.f32 %v519, %v533
    %v536 = vadd.f32 %v520, %v534
    %v537 = vlaneseq
    %v538 = vshrl.u32 %v537, 7
    %v539 = vsub.s32 5, %v538
    %v540 = vrot.slane %v454, %v539
    %v541 = vlaneseq
    %v542 = vshrl.u32 %v541, 7
    %v543 = vsub.s32 5, %v542
    %v544 = vrot.slane %v455, %v543
    %545 = vset.pattern.permute.xlu0 5
    %546 = vperm.xlu0 %545, %v456
    %v547 = vpop.permute.xlu0 %546
    %v549 = vmul.f32 %v540, %v547
    %v550 = vmul.f32 %v544, %v547
    %v551 = vadd.f32 %v535, %v549
    %v552 = vadd.f32 %v536, %v550
    %v553 = vlaneseq
    %v554 = vshrl.u32 %v553, 7
    %v555 = vsub.s32 6, %v554
    %v556 = vrot.slane %v454, %v555
    %v557 = vlaneseq
    %v558 = vshrl.u32 %v557, 7
    %v559 = vsub.s32 6, %v558
    %v560 = vrot.slane %v455, %v559
    %561 = vset.pattern.permute.xlu0 6
    %562 = vperm.xlu0 %561, %v456
    %v563 = vpop.permute.xlu0 %562
    %v565 = vmul.f32 %v556, %v563
    %v566 = vmul.f32 %v560, %v563
    %v567 = vadd.f32 %v551, %v565
    %v568 = vadd.f32 %v552, %v566
    %v569 = vlaneseq
    %v570 = vshrl.u32 %v569, 7
    %v571 = vsub.s32 7, %v570
    %v572 = vrot.slane %v454, %v571
    %v573 = vlaneseq
    %v574 = vshrl.u32 %v573, 7
    %v575 = vsub.s32 7, %v574
    %v576 = vrot.slane %v455, %v575
    %577 = vset.pattern.permute.xlu0 7
    %578 = vperm.xlu0 %577, %v456
    %v579 = vpop.permute.xlu0 %578
    %v581 = vmul.f32 %v572, %v579
    %v582 = vmul.f32 %v576, %v579
    %v583 = vadd.f32 %v567, %v581
    %v584 = vadd.f32 %v568, %v582
    %586 = vset.pattern.permute.xlu0 0
    %587 = vperm.xlu0 %586, %v457
    %v588 = vpop.permute.xlu0 %587
    %v590 = vadd.f32 %v583, %v588
    %v591 = vadd.f32 %v584, %v588
    %v592 = vtanh.pop %v590
    %v593 = vtanh.pop %v591
    %v594 = vld [vmem:[#allocation5 + $0x370] sm:$0x7f]
    %v595 = vld [vmem:[#allocation5 + $0x380] sm:$0x7f]
    %v596 = vlaneseq
    %v597 = vshrl.u32 %v596, 7
    %v598 = vsub.s32 0, %v597
    %v599 = vrot.slane %v592, %v598
    %v600 = vlaneseq
    %v601 = vshrl.u32 %v600, 7
    %v602 = vsub.s32 0, %v601
    %v603 = vrot.slane %v593, %v602
    %605 = vset.pattern.permute.xlu0 0
    %606 = vperm.xlu0 %605, %v594
    %v607 = vpop.permute.xlu0 %606
    %v609 = vmul.f32 %v599, %v607
    %v610 = vmul.f32 %v603, %v607
    %v611 = vlaneseq
    %v612 = vshrl.u32 %v611, 7
    %v613 = vsub.s32 1, %v612
    %v614 = vrot.slane %v592, %v613
    %v615 = vlaneseq
    %v616 = vshrl.u32 %v615, 7
    %v617 = vsub.s32 1, %v616
    %v618 = vrot.slane %v593, %v617
    %619 = vset.pattern.permute.xlu0 1
    %620 = vperm.xlu0 %619, %v594
    %v621 = vpop.permute.xlu0 %620
    %v623 = vmul.f32 %v614, %v621
    %v624 = vmul.f32 %v618, %v621
    %v625 = vadd.f32 %v609, %v623
    %v626 = vadd.f32 %v610, %v624
    %628 = vset.pattern.permute.xlu0 0
    %629 = vperm.xlu0 %628, %v595
    %v630 = vpop.permute.xlu0 %629
    %v632 = vadd.f32 %v625, %v630
    %v633 = vadd.f32 %v626, %v630
    %v634 = vtanh.pop %v632
    %v635 = vtanh.pop %v633
    %v636 = vld [vmem:[#allocation5 + $0x390] sm:$0xff]
    %v637 = vld [vmem:[#allocation5 + $0x3a0] sm:$0xff]
    %v638 = vlaneseq
    %v639 = vshrl.u32 %v638, 7
    %v640 = vsub.s32 0, %v639
    %v641 = vrot.slane %v634, %v640
    %v642 = vlaneseq
    %v643 = vshrl.u32 %v642, 7
    %v644 = vsub.s32 0, %v643
    %v645 = vrot.slane %v635, %v644
    %647 = vset.pattern.permute.xlu0 0
    %648 = vperm.xlu0 %647, %v636
    %v649 = vpop.permute.xlu0 %648
    %v651 = vmul.f32 %v641, %v649
    %v652 = vmul.f32 %v645, %v649
    %v653 = vlaneseq
    %v654 = vshrl.u32 %v653, 7
    %v655 = vsub.s32 1, %v654
    %v656 = vrot.slane %v634, %v655
    %v657 = vlaneseq
    %v658 = vshrl.u32 %v657, 7
    %v659 = vsub.s32 1, %v658
    %v660 = vrot.slane %v635, %v659
    %661 = vset.pattern.permute.xlu0 1
    %662 = vperm.xlu0 %661, %v636
    %v663 = vpop.permute.xlu0 %662
    %v665 = vmul.f32 %v656, %v663
    %v666 = vmul.f32 %v660, %v663
    %v667 = vadd.f32 %v651, %v665
    %v668 = vadd.f32 %v652, %v666
    %v669 = vlaneseq
    %v670 = vshrl.u32 %v669, 7
    %v671 = vsub.s32 2, %v670
    %v672 = vrot.slane %v634, %v671
    %v673 = vlaneseq
    %v674 = vshrl.u32 %v673, 7
    %v675 = vsub.s32 2, %v674
    %v676 = vrot.slane %v635, %v675
    %677 = vset.pattern.permute.xlu0 2
    %678 = vperm.xlu0 %677, %v636
    %v679 = vpop.permute.xlu0 %678
    %v681 = vmul.f32 %v672, %v679
    %v682 = vmul.f32 %v676, %v679
    %v683 = vadd.f32 %v667, %v681
    %v684 = vadd.f32 %v668, %v682
    %v685 = vlaneseq
    %v686 = vshrl.u32 %v685, 7
    %v687 = vsub.s32 3, %v686
    %v688 = vrot.slane %v634, %v687
    %v689 = vlaneseq
    %v690 = vshrl.u32 %v689, 7
    %v691 = vsub.s32 3, %v690
    %v692 = vrot.slane %v635, %v691
    %693 = vset.pattern.permute.xlu0 3
    %694 = vperm.xlu0 %693, %v636
    %v695 = vpop.permute.xlu0 %694
    %v697 = vmul.f32 %v688, %v695
    %v698 = vmul.f32 %v692, %v695
    %v699 = vadd.f32 %v683, %v697
    %v700 = vadd.f32 %v684, %v698
    %v701 = vlaneseq
    %v702 = vshrl.u32 %v701, 7
    %v703 = vsub.s32 4, %v702
    %v704 = vrot.slane %v634, %v703
    %v705 = vlaneseq
    %v706 = vshrl.u32 %v705, 7
    %v707 = vsub.s32 4, %v706
    %v708 = vrot.slane %v635, %v707
    %709 = vset.pattern.permute.xlu0 4
    %710 = vperm.xlu0 %709, %v636
    %v711 = vpop.permute.xlu0 %710
    %v713 = vmul.f32 %v704, %v711
    %v714 = vmul.f32 %v708, %v711
    %v715 = vadd.f32 %v699, %v713
    %v716 = vadd.f32 %v700, %v714
    %v717 = vlaneseq
    %v718 = vshrl.u32 %v717, 7
    %v719 = vsub.s32 5, %v718
    %v720 = vrot.slane %v634, %v719
    %v721 = vlaneseq
    %v722 = vshrl.u32 %v721, 7
    %v723 = vsub.s32 5, %v722
    %v724 = vrot.slane %v635, %v723
    %725 = vset.pattern.permute.xlu0 5
    %726 = vperm.xlu0 %725, %v636
    %v727 = vpop.permute.xlu0 %726
    %v729 = vmul.f32 %v720, %v727
    %v730 = vmul.f32 %v724, %v727
    %v731 = vadd.f32 %v715, %v729
    %v732 = vadd.f32 %v716, %v730
    %v733 = vlaneseq
    %v734 = vshrl.u32 %v733, 7
    %v735 = vsub.s32 6, %v734
    %v736 = vrot.slane %v634, %v735
    %v737 = vlaneseq
    %v738 = vshrl.u32 %v737, 7
    %v739 = vsub.s32 6, %v738
    %v740 = vrot.slane %v635, %v739
    %741 = vset.pattern.permute.xlu0 6
    %742 = vperm.xlu0 %741, %v636
    %v743 = vpop.permute.xlu0 %742
    %v745 = vmul.f32 %v736, %v743
    %v746 = vmul.f32 %v740, %v743
    %v747 = vadd.f32 %v731, %v745
    %v748 = vadd.f32 %v732, %v746
    %750 = vset.pattern.permute.xlu0 0
    %751 = vperm.xlu0 %750, %v637
    %v752 = vpop.permute.xlu0 %751
    %v754 = vadd.f32 %v747, %v752
    %v755 = vadd.f32 %v748, %v752
    %v756 = vadd.f32 %v408, %v754
    %v757 = vadd.f32 %v409, %v755
    %v758 = vld [vmem:[#allocation5 + $0x780] sm:$0xff]
    %v759 = vld [vmem:[#allocation5 + $0x790] sm:$0xff]
    %v760 = vsel %vm44, %v756, 0.0
    %v761 = vrot.slane %v760, 4
    %v762 = vadd.f32 %v760, %v761
    %v763 = vrot.slane %v762, 2
    %v764 = vadd.f32 %v762, %v763
    %v765 = vrot.slane %v764, 1
    %v766 = vadd.f32 %v764, %v765
    %v767 = vsel %vm44, %v757, 0.0
    %v768 = vrot.slane %v767, 4
    %v769 = vadd.f32 %v767, %v768
    %v770 = vrot.slane %v769, 2
    %v771 = vadd.f32 %v769, %v770
    %v772 = vrot.slane %v771, 1
    %v773 = vadd.f32 %v771, %v772
    %v774 = vmul.f32 %v766, %v59
    %v775 = vmul.f32 %v773, %v59
    %v776 = vsub.f32 %v756, %v774
    %v777 = vsub.f32 %v757, %v775
    %v778 = vmul.f32 %v776, %v776
    %v779 = vmul.f32 %v777, %v777
    %v780 = vsel %vm44, %v778, 0.0
    %v781 = vrot.slane %v780, 4
    %v782 = vadd.f32 %v780, %v781
    %v783 = vrot.slane %v782, 2
    %v784 = vadd.f32 %v782, %v783
    %v785 = vrot.slane %v784, 1
    %v786 = vadd.f32 %v784, %v785
    %v787 = vsel %vm44, %v779, 0.0
    %v788 = vrot.slane %v787, 4
    %v789 = vadd.f32 %v787, %v788
    %v790 = vrot.slane %v789, 2
    %v791 = vadd.f32 %v789, %v790
    %v792 = vrot.slane %v791, 1
    %v793 = vadd.f32 %v791, %v792
    %v794 = vmul.f32 %v786, %v59
    %v795 = vmul.f32 %v793, %v59
    %v796 = vadd.f32 %v794, 1e-05
    %v797 = vadd.f32 %v795, 1e-05
    %v798 = vrsqrt.pop %v796
    %v799 = vrsqrt.pop %v797
    %v800 = vmul.f32 %v776, %v798
    %v801 = vmul.f32 %v777, %v799
    %803 = vset.pattern.permute.xlu0 0
    %804 = vperm.xlu0 %803, %v758
    %v805 = vpop.permute.xlu0 %804
    %v807 = vmul.f32 %v800, %v805
    %v808 = vmul.f32 %v801, %v805
    %810 = vset.pattern.permute.xlu0 0
    %811 = vperm.xlu0 %810, %v759
    %v812 = vpop.permute.xlu0 %811
    %v814 = vadd.f32 %v807, %v812
    %v815 = vadd.f32 %v808, %v812
    %v816 = vld [vmem:[#allocation5 + $0x3d0] sm:$0xff]
    %v817 = vld [vmem:[#allocation5 + $0x3d8] sm:$0xff]
    %v818 = vld [vmem:[#allocation5 + $0x3e0] sm:$0xff]
    %v819 = vld [vmem:[#allocation5 + $0x3e8] sm:$0xff]
    %s820 = scalar_lea.vmem [#allocation5], 1008
    %v821 = vld [vmem:[%s820] ss:$8 sm:$0x3]
    %v823 = vlaneseq
    %v824 = vshrl.u32 %v823, 7
    %v825 = vsub.s32 0, %v824
    %v826 = vrot.slane %v821, %v825
    %v827 = vlaneseq
    %v828 = vshrl.u32 %v827, 7
    %v829 = vsub.s32 1, %v828
    %v830 = vrot.slane %v821, %v829
    %v834 = vsel %vm44, %v814, 0
    %v837 = vsel %vm44, %v815, 0
    %839 = vmatprep.subr.mxu0 %v817
    %840 = vmatpush1.msra.mxu0 %v816
    %841 = vmatprep.subr.mxu0 %v819
    %842 = vmatpush1.msra.mxu0 %v818
    %843 = vmatprep.subr.mxu0 0.0
    %844 = vmatpush1.msra.mxu0 0.0
    %845 = vmatprep.subr.mxu0 0.0
    %846 = vmatpush1.msra.mxu0 0.0
    %847 = vmatprep.subr.mxu0 0.0
    %848 = vmatpush1.msra.mxu0 0.0
    %849 = vmatprep.subr.mxu0 0.0
    %850 = vmatpush1.msra.mxu0 0.0
    %851 = vmatprep.subr.mxu0 0.0
    %852 = vmatpush1.msra.mxu0 0.0
    %853 = vmatprep.subr.mxu0 0.0
    %854 = vmatpush1.msra.mxu0 0.0
    %855 = vmatprep.subr.mxu0 0.0
    %856 = vmatpush1.msra.mxu0 0.0
    %857 = vmatprep.subr.mxu0 0.0
    %858 = vmatpush1.msra.mxu0 0.0
    %859 = vmatprep.subr.mxu0 0.0
    %860 = vmatpush1.msra.mxu0 0.0
    %861 = vmatprep.subr.mxu0 0.0
    %862 = vmatpush1.msra.mxu0 0.0
    %863 = vmatprep.subr.mxu0 0.0
    %864 = vmatpush1.msra.mxu0 0.0
    %865 = vmatprep.subr.mxu0 0.0
    %866 = vmatpush1.msra.mxu0 0.0
    %867 = vmatprep.subr.mxu0 0.0
    %868 = vmatpush1.msra.mxu0 0.0
    %869 = vmatprep.subr.mxu0 0.0
    %870 = vmatpush1.msra.mxu0 0.0
    %871 = vmatprep.subr.mxu0 0.0
    %872 = vmatpush1.msra.mxu0 0.0
    %873 = vmatprep.subr.mxu0 0.0
    %874 = vmatpush1.msra.mxu0 0.0
    %875 = vmatprep.subr.mxu0 0.0
    %876 = vmatpush1.msra.mxu0 0.0
    %877 = vmatprep.subr.mxu0 0.0
    %878 = vmatpush1.msra.mxu0 0.0
    %879 = vmatprep.subr.mxu0 0.0
    %880 = vmatpush1.msra.mxu0 0.0
    %881 = vmatprep.subr.mxu0 0.0
    %882 = vmatpush1.msra.mxu0 0.0
    %883 = vmatprep.subr.mxu0 0.0
    %884 = vmatpush1.msra.mxu0 0.0
    %885 = vmatprep.subr.mxu0 0.0
    %886 = vmatpush1.msra.mxu0 0.0
    %887 = vmatprep.subr.mxu0 0.0
    %888 = vmatpush1.msra.mxu0 0.0
    %889 = vmatprep.subr.mxu0 0.0
    %890 = vmatpush1.msra.mxu0 0.0
    %891 = vmatprep.subr.mxu0 0.0
    %892 = vmatpush1.msra.mxu0 0.0
    %893 = vmatprep.subr.mxu0 0.0
    %894 = vmatpush1.msra.mxu0 0.0
    %895 = vmatprep.subr.mxu0 0.0
    %896 = vmatpush1.msra.mxu0 0.0
    %897 = vmatprep.subr.mxu0 0.0
    %898 = vmatpush1.msra.mxu0 0.0
    %899 = vmatprep.subr.mxu0 0.0
    %900 = vmatpush1.msra.mxu0 0.0
    %901 = vmatprep.subr.mxu0 0.0
    %902 = vmatpush1.msra.mxu0 0.0
    %903 = vmatprep.mubr.f32.mxu0 0.0
    %904 = vmatmul.mubr.f32.gmra.mrb[0].mxu0 %v834
    %v905 = vpop.f32.mrb[0].mxu0
    %v906 = vadd.f32 %v826, %v905
    %v907 = vpop.f32.mrb[0].mxu0
    %v908 = vadd.f32 %v830, %v907
    %909 = vmatprep.mubr.f32.mxu0 0.0
    %910 = vmatmul.mubr.f32.gmra.mrb[0].mxu0 %v837
    %v911 = vpop.f32.mrb[0].mxu0
    %v912 = vadd.f32 %v826, %v911
    %v913 = vpop.f32.mrb[0].mxu0
    %v914 = vadd.f32 %v830, %v913
    %915 = vdwg.mxu0
    %v916 = vtanh.pop %v906
    %v917 = vtanh.pop %v908
    %v918 = vtanh.pop %v912
    %v919 = vtanh.pop %v914
    %v920 = vld [vmem:[#allocation5 + $0x400] sm:$0xff]
    %v921 = vld [vmem:[#allocation5 + $0x410] sm:$0xff]
    %v922 = vld [vmem:[#allocation5 + $0x420] sm:$0xff]
    %v923 = vld [vmem:[#allocation5 + $0x430] sm:$0xff]
    %v924 = vld [vmem:[#allocation5 + $0x440] sm:$0xff]
    %v925 = vld [vmem:[#allocation5 + $0x450] sm:$0xff]
    %v926 = vld [vmem:[#allocation5 + $0x460] sm:$0xff]
    %v927 = vld [vmem:[#allocation5 + $0x470] sm:$0xff]
    %v928 = vld [vmem:[#allocation5 + $0x480] sm:$0xff]
    %v929 = vld [vmem:[#allocation5 + $0x490] sm:$0xff]
    %v930 = vld [vmem:[#allocation5 + $0x4a0] sm:$0xff]
    %v931 = vld [vmem:[#allocation5 + $0x4b0] sm:$0xff]
    %v932 = vld [vmem:[#allocation5 + $0x4c0] sm:$0xff]
    %v933 = vld [vmem:[#allocation5 + $0x4d0] sm:$0xff]
    %v934 = vld [vmem:[#allocation5 + $0x4e0] sm:$0xff]
    %v935 = vld [vmem:[#allocation5 + $0x4f0] sm:$0xff]
    %v936 = vld [vmem:[#allocation5 + $0x500] sm:$0xff]
    %v937 = vld [vmem:[#allocation5 + $0x510] sm:$0xff]
    %v938 = vld [vmem:[#allocation5 + $0x520] sm:$0xff]
    %v939 = vld [vmem:[#allocation5 + $0x530] sm:$0xff]
    %v940 = vld [vmem:[#allocation5 + $0x540] sm:$0xff]
    %v941 = vld [vmem:[#allocation5 + $0x550] sm:$0xff]
    %v942 = vld [vmem:[#allocation5 + $0x560] sm:$0xff]
    %v943 = vld [vmem:[#allocation5 + $0x570] sm:$0xff]
    %v944 = vld [vmem:[#allocation5 + $0x580] sm:$0xff]
    %v945 = vld [vmem:[#allocation5 + $0x590] sm:$0xff]
    %v946 = vld [vmem:[#allocation5 + $0x5a0] sm:$0xff]
    %v947 = vld [vmem:[#allocation5 + $0x5b0] sm:$0xff]
    %v948 = vld [vmem:[#allocation5 + $0x5c0] sm:$0xff]
    %v949 = vld [vmem:[#allocation5 + $0x5d0] sm:$0xff]
    %v950 = vld [vmem:[#allocation5 + $0x5e0] sm:$0xff]
    %v951 = vld [vmem:[#allocation5 + $0x5f0] sm:$0xff]
    %v952 = vld [vmem:[#allocation5 + $0x600] ss:$0 sm:$0xff]
    %953 = vmatprep.subr.mxu0 0.0
    %954 = vmatpush1.msra.mxu0 %v920
    %955 = vmatprep.subr.mxu0 0.0
    %956 = vmatpush1.msra.mxu0 %v921
    %957 = vmatprep.subr.mxu0 0.0
    %958 = vmatpush1.msra.mxu0 %v922
    %959 = vmatprep.subr.mxu0 0.0
    %960 = vmatpush1.msra.mxu0 %v923
    %961 = vmatprep.subr.mxu0 0.0
    %962 = vmatpush1.msra.mxu0 %v924
    %963 = vmatprep.subr.mxu0 0.0
    %964 = vmatpush1.msra.mxu0 %v925
    %965 = vmatprep.subr.mxu0 0.0
    %966 = vmatpush1.msra.mxu0 %v926
    %967 = vmatprep.subr.mxu0 0.0
    %968 = vmatpush1.msra.mxu0 %v927
    %969 = vmatprep.subr.mxu0 0.0
    %970 = vmatpush1.msra.mxu0 %v928
    %971 = vmatprep.subr.mxu0 0.0
    %972 = vmatpush1.msra.mxu0 %v929
    %973 = vmatprep.subr.mxu0 0.0
    %974 = vmatpush1.msra.mxu0 %v930
    %975 = vmatprep.subr.mxu0 0.0
    %976 = vmatpush1.msra.mxu0 %v931
    %977 = vmatprep.subr.mxu0 0.0
    %978 = vmatpush1.msra.mxu0 %v932
    %979 = vmatprep.subr.mxu0 0.0
    %980 = vmatpush1.msra.mxu0 %v933
    %981 = vmatprep.subr.mxu0 0.0
    %982 = vmatpush1.msra.mxu0 %v934
    %983 = vmatprep.subr.mxu0 0.0
    %984 = vmatpush1.msra.mxu0 %v935
    %985 = vmatprep.subr.mxu0 0.0
    %986 = vmatpush1.msra.mxu0 %v936
    %987 = vmatprep.subr.mxu0 0.0
    %988 = vmatpush1.msra.mxu0 %v937
    %989 = vmatprep.subr.mxu0 0.0
    %990 = vmatpush1.msra.mxu0 %v938
    %991 = vmatprep.subr.mxu0 0.0
    %992 = vmatpush1.msra.mxu0 %v939
    %993 = vmatprep.subr.mxu0 0.0
    %994 = vmatpush1.msra.mxu0 %v940
    %995 = vmatprep.subr.mxu0 0.0
    %996 = vmatpush1.msra.mxu0 %v941
    %997 = vmatprep.subr.mxu0 0.0
    %998 = vmatpush1.msra.mxu0 %v942
    %999 = vmatprep.subr.mxu0 0.0
    %1000 = vmatpush1.msra.mxu0 %v943
    %1001 = vmatprep.subr.mxu0 0.0
    %1002 = vmatpush1.msra.mxu0 %v944
    %1003 = vmatprep.subr.mxu0 0.0
    %1004 = vmatpush1.msra.mxu0 %v945
    %1005 = vmatprep.subr.mxu0 0.0
    %1006 = vmatpush1.msra.mxu0 %v946
    %1007 = vmatprep.subr.mxu0 0.0
    %1008 = vmatpush1.msra.mxu0 %v947
    %1009 = vmatprep.subr.mxu0 0.0
    %1010 = vmatpush1.msra.mxu0 %v948
    %1011 = vmatprep.subr.mxu0 0.0
    %1012 = vmatpush1.msra.mxu0 %v949
    %1013 = vmatprep.subr.mxu0 0.0
    %1014 = vmatpush1.msra.mxu0 %v950
    %1015 = vmatprep.subr.mxu0 0.0
    %1016 = vmatpush1.msra.mxu0 %v951
    %1017 = vmatprep.mubr.f32.mxu0 %v917
    %1018 = vmatmul.mubr.f32.gmra.mrb[0].mxu0 %v916
    %v1019 = vpop.f32.mrb[0].mxu0
    %v1020 = vadd.f32 %v952, %v1019
    %v1021 = vpop.f32.mrb[0].mxu0
    %1022 = vmatprep.mubr.f32.mxu0 %v919
    %1023 = vmatmul.mubr.f32.gmra.mrb[0].mxu0 %v918
    %v1024 = vpop.f32.mrb[0].mxu0
    %v1025 = vadd.f32 %v952, %v1024
    %v1026 = vpop.f32.mrb[0].mxu0
    %1027 = vdwg.mxu0
    %v1028 = vtanh.pop %v1020
    %v1029 = vtanh.pop %v1025
    %v1030 = vld [vmem:[#allocation5 + $0x610] sm:$0xff]
    %v1031 = vld [vmem:[#allocation5 + $0x620] sm:$0xff]
    %v1032 = vld [vmem:[#allocation5 + $0x630] sm:$0xff]
    %v1033 = vld [vmem:[#allocation5 + $0x640] sm:$0xff]
    %v1034 = vld [vmem:[#allocation5 + $0x650] sm:$0xff]
    %v1035 = vld [vmem:[#allocation5 + $0x660] sm:$0xff]
    %v1036 = vld [vmem:[#allocation5 + $0x670] sm:$0xff]
    %v1037 = vld [vmem:[#allocation5 + $0x680] sm:$0xff]
    %v1038 = vld [vmem:[#allocation5 + $0x690] sm:$0xff]
    %v1039 = vld [vmem:[#allocation5 + $0x6a0] sm:$0xff]
    %v1040 = vld [vmem:[#allocation5 + $0x6b0] sm:$0xff]
    %v1041 = vld [vmem:[#allocation5 + $0x6c0] sm:$0xff]
    %v1042 = vld [vmem:[#allocation5 + $0x6d0] sm:$0xff]
    %v1043 = vld [vmem:[#allocation5 + $0x6e0] sm:$0xff]
    %v1044 = vld [vmem:[#allocation5 + $0x6f0] sm:$0xff]
    %v1045 = vld [vmem:[#allocation5 + $0x700] sm:$0xff]
    %v1046 = vld [vmem:[#allocation5 + $0x710] ss:$0 sm:$0xff]
    %1047 = vmatprep.subr.mxu0 0.0
    %1048 = vmatpush1.msra.mxu0 %v1030
    %1049 = vmatprep.subr.mxu0 0.0
    %1050 = vmatpush1.msra.mxu0 %v1031
    %1051 = vmatprep.subr.mxu0 0.0
    %1052 = vmatpush1.msra.mxu0 %v1032
    %1053 = vmatprep.subr.mxu0 0.0
    %1054 = vmatpush1.msra.mxu0 %v1033
    %1055 = vmatprep.subr.mxu0 0.0
    %1056 = vmatpush1.msra.mxu0 %v1034
    %1057 = vmatprep.subr.mxu0 0.0
    %1058 = vmatpush1.msra.mxu0 %v1035
    %1059 = vmatprep.subr.mxu0 0.0
    %1060 = vmatpush1.msra.mxu0 %v1036
    %1061 = vmatprep.subr.mxu0 0.0
    %1062 = vmatpush1.msra.mxu0 %v1037
    %1063 = vmatprep.subr.mxu0 0.0
    %1064 = vmatpush1.msra.mxu0 %v1038
    %1065 = vmatprep.subr.mxu0 0.0
    %1066 = vmatpush1.msra.mxu0 %v1039
    %1067 = vmatprep.subr.mxu0 0.0
    %1068 = vmatpush1.msra.mxu0 %v1040
    %1069 = vmatprep.subr.mxu0 0.0
    %1070 = vmatpush1.msra.mxu0 %v1041
    %1071 = vmatprep.subr.mxu0 0.0
    %1072 = vmatpush1.msra.mxu0 %v1042
    %1073 = vmatprep.subr.mxu0 0.0
    %1074 = vmatpush1.msra.mxu0 %v1043
    %1075 = vmatprep.subr.mxu0 0.0
    %1076 = vmatpush1.msra.mxu0 %v1044
    %1077 = vmatprep.subr.mxu0 0.0
    %1078 = vmatpush1.msra.mxu0 %v1045
    %1079 = vmatprep.subr.mxu0 0.0
    %1080 = vmatpush1.msra.mxu0 0.0
    %1081 = vmatprep.subr.mxu0 0.0
    %1082 = vmatpush1.msra.mxu0 0.0
    %1083 = vmatprep.subr.mxu0 0.0
    %1084 = vmatpush1.msra.mxu0 0.0
    %1085 = vmatprep.subr.mxu0 0.0
    %1086 = vmatpush1.msra.mxu0 0.0
    %1087 = vmatprep.subr.mxu0 0.0
    %1088 = vmatpush1.msra.mxu0 0.0
    %1089 = vmatprep.subr.mxu0 0.0
    %1090 = vmatpush1.msra.mxu0 0.0
    %1091 = vmatprep.subr.mxu0 0.0
    %1092 = vmatpush1.msra.mxu0 0.0
    %1093 = vmatprep.subr.mxu0 0.0
    %1094 = vmatpush1.msra.mxu0 0.0
    %1095 = vmatprep.subr.mxu0 0.0
    %1096 = vmatpush1.msra.mxu0 0.0
    %1097 = vmatprep.subr.mxu0 0.0
    %1098 = vmatpush1.msra.mxu0 0.0
    %1099 = vmatprep.subr.mxu0 0.0
    %1100 = vmatpush1.msra.mxu0 0.0
    %1101 = vmatprep.subr.mxu0 0.0
    %1102 = vmatpush1.msra.mxu0 0.0
    %1103 = vmatprep.subr.mxu0 0.0
    %1104 = vmatpush1.msra.mxu0 0.0
    %1105 = vmatprep.subr.mxu0 0.0
    %1106 = vmatpush1.msra.mxu0 0.0
    %1107 = vmatprep.subr.mxu0 0.0
    %1108 = vmatpush1.msra.mxu0 0.0
    %1109 = vmatprep.subr.mxu0 0.0
    %1110 = vmatpush1.msra.mxu0 0.0
    %1111 = vmatprep.mubr.f32.mxu0 0.0
    %1112 = vmatmul.mubr.f32.gmra.mrb[0].mxu0 %v1028
    %v1113 = vpop.f32.mrb[0].mxu0
    %v1114 = vadd.f32 %v1046, %v1113
    %v1115 = vpop.f32.mrb[0].mxu0
    %1116 = vmatprep.mubr.f32.mxu0 0.0
    %1117 = vmatmul.mubr.f32.gmra.mrb[0].mxu0 %v1029
    %v1118 = vpop.f32.mrb[0].mxu0
    %v1119 = vadd.f32 %v1046, %v1118
    %v1120 = vpop.f32.mrb[0].mxu0
    %1121 = vdwg.mxu0
    %v1122 = vadd.f32 %v1114, %v756
    %v1123 = vadd.f32 %v1119, %v757
    %v1124 = vsel %vm44, %v1122, 0.0
    %v1125 = vrot.slane %v1124, 4
    %v1126 = vadd.f32 %v1124, %v1125
    %v1127 = vrot.slane %v1126, 2
    %v1128 = vadd.f32 %v1126, %v1127
    %v1129 = vrot.slane %v1128, 1
    %v1130 = vadd.f32 %v1128, %v1129
    %v1131 = vsel %vm44, %v1123, 0.0
    %v1132 = vrot.slane %v1131, 4
    %v1133 = vadd.f32 %v1131, %v1132
    %v1134 = vrot.slane %v1133, 2
    %v1135 = vadd.f32 %v1133, %v1134
    %v1136 = vrot.slane %v1135, 1
    %v1137 = vadd.f32 %v1135, %v1136
    %v1138 = vmul.f32 %v1130, %v59
    %v1139 = vmul.f32 %v1137, %v59
    %v1140 = vsub.f32 %v1122, %v1138
    %v1141 = vsub.f32 %v1123, %v1139
    %v1142 = vmul.f32 %v1140, %v1140
    %v1143 = vmul.f32 %v1141, %v1141
    %v1144 = vsel %vm44, %v1142, 0.0
    %v1145 = vrot.slane %v1144, 4
    %v1146 = vadd.f32 %v1144, %v1145
    %v1147 = vrot.slane %v1146, 2
    %v1148 = vadd.f32 %v1146, %v1147
    %v1149 = vrot.slane %v1148, 1
    %v1150 = vadd.f32 %v1148, %v1149
    %v1151 = vsel %vm44, %v1143, 0.0
    %v1152 = vrot.slane %v1151, 4
    %v1153 = vadd.f32 %v1151, %v1152
    %v1154 = vrot.slane %v1153, 2
    %v1155 = vadd.f32 %v1153, %v1154
    %v1156 = vrot.slane %v1155, 1
    %v1157 = vadd.f32 %v1155, %v1156
    %v1158 = vmul.f32 %v1150, %v59
    %v1159 = vmul.f32 %v1157, %v59
    %v1160 = vadd.f32 %v1158, 1e-05
    %v1161 = vadd.f32 %v1159, 1e-05
    %v1162 = vrsqrt.pop %v1160
    %v1163 = vrsqrt.pop %v1161
    %v1164 = vmul.f32 %v1140, %v1162
    %v1165 = vmul.f32 %v1141, %v1163
    %v1166 = vmul.f32 %v1164, %v805
    %v1167 = vmul.f32 %v1165, %v805
    %v1168 = vadd.f32 %v1166, %v812
    %v1169 = vadd.f32 %v1167, %v812
    %v1170 = vld [vmem:[#allocation5 + $0x720] sm:$0x3]
    %v1171 = vld [vmem:[#allocation5 + $0x730] sm:$0x3]
    %v1172 = vlaneseq
    %v1173 = vshrl.u32 %v1172, 7
    %v1174 = vsub.s32 0, %v1173
    %v1175 = vrot.slane %v1168, %v1174
    %v1176 = vlaneseq
    %v1177 = vshrl.u32 %v1176, 7
    %v1178 = vsub.s32 0, %v1177
    %v1179 = vrot.slane %v1169, %v1178
    %1181 = vset.pattern.permute.xlu0 0
    %1182 = vperm.xlu0 %1181, %v1170
    %v1183 = vpop.permute.xlu0 %1182
    %v1185 = vmul.f32 %v1175, %v1183
    %v1186 = vmul.f32 %v1179, %v1183
    %v1187 = vlaneseq
    %v1188 = vshrl.u32 %v1187, 7
    %v1189 = vsub.s32 1, %v1188
    %v1190 = vrot.slane %v1168, %v1189
    %v1191 = vlaneseq
    %v1192 = vshrl.u32 %v1191, 7
    %v1193 = vsub.s32 1, %v1192
    %v1194 = vrot.slane %v1169, %v1193
    %1195 = vset.pattern.permute.xlu0 1
    %1196 = vperm.xlu0 %1195, %v1170
    %v1197 = vpop.permute.xlu0 %1196
    %v1199 = vmul.f32 %v1190, %v1197
    %v1200 = vmul.f32 %v1194, %v1197
    %v1201 = vadd.f32 %v1185, %v1199
    %v1202 = vadd.f32 %v1186, %v1200
    %v1203 = vlaneseq
    %v1204 = vshrl.u32 %v1203, 7
    %v1205 = vsub.s32 2, %v1204
    %v1206 = vrot.slane %v1168, %v1205
    %v1207 = vlaneseq
    %v1208 = vshrl.u32 %v1207, 7
    %v1209 = vsub.s32 2, %v1208
    %v1210 = vrot.slane %v1169, %v1209
    %1211 = vset.pattern.permute.xlu0 2
    %1212 = vperm.xlu0 %1211, %v1170
    %v1213 = vpop.permute.xlu0 %1212
    %v1215 = vmul.f32 %v1206, %v1213
    %v1216 = vmul.f32 %v1210, %v1213
    %v1217 = vadd.f32 %v1201, %v1215
    %v1218 = vadd.f32 %v1202, %v1216
    %v1219 = vlaneseq
    %v1220 = vshrl.u32 %v1219, 7
    %v1221 = vsub.s32 3, %v1220
    %v1222 = vrot.slane %v1168, %v1221
    %v1223 = vlaneseq
    %v1224 = vshrl.u32 %v1223, 7
    %v1225 = vsub.s32 3, %v1224
    %v1226 = vrot.slane %v1169, %v1225
    %1227 = vset.pattern.permute.xlu0 3
    %1228 = vperm.xlu0 %1227, %v1170
    %v1229 = vpop.permute.xlu0 %1228
    %v1231 = vmul.f32 %v1222, %v1229
    %v1232 = vmul.f32 %v1226, %v1229
    %v1233 = vadd.f32 %v1217, %v1231
    %v1234 = vadd.f32 %v1218, %v1232
    %v1235 = vlaneseq
    %v1236 = vshrl.u32 %v1235, 7
    %v1237 = vsub.s32 4, %v1236
    %v1238 = vrot.slane %v1168, %v1237
    %v1239 = vlaneseq
    %v1240 = vshrl.u32 %v1239, 7
    %v1241 = vsub.s32 4, %v1240
    %v1242 = vrot.slane %v1169, %v1241
    %1243 = vset.pattern.permute.xlu0 4
    %1244 = vperm.xlu0 %1243, %v1170
    %v1245 = vpop.permute.xlu0 %1244
    %v1247 = vmul.f32 %v1238, %v1245
    %v1248 = vmul.f32 %v1242, %v1245
    %v1249 = vadd.f32 %v1233, %v1247
    %v1250 = vadd.f32 %v1234, %v1248
    %v1251 = vlaneseq
    %v1252 = vshrl.u32 %v1251, 7
    %v1253 = vsub.s32 5, %v1252
    %v1254 = vrot.slane %v1168, %v1253
    %v1255 = vlaneseq
    %v1256 = vshrl.u32 %v1255, 7
    %v1257 = vsub.s32 5, %v1256
    %v1258 = vrot.slane %v1169, %v1257
    %1259 = vset.pattern.permute.xlu0 5
    %1260 = vperm.xlu0 %1259, %v1170
    %v1261 = vpop.permute.xlu0 %1260
    %v1263 = vmul.f32 %v1254, %v1261
    %v1264 = vmul.f32 %v1258, %v1261
    %v1265 = vadd.f32 %v1249, %v1263
    %v1266 = vadd.f32 %v1250, %v1264
    %v1267 = vlaneseq
    %v1268 = vshrl.u32 %v1267, 7
    %v1269 = vsub.s32 6, %v1268
    %v1270 = vrot.slane %v1168, %v1269
    %v1271 = vlaneseq
    %v1272 = vshrl.u32 %v1271, 7
    %v1273 = vsub.s32 6, %v1272
    %v1274 = vrot.slane %v1169, %v1273
    %1275 = vset.pattern.permute.xlu0 6
    %1276 = vperm.xlu0 %1275, %v1170
    %v1277 = vpop.permute.xlu0 %1276
    %v1279 = vmul.f32 %v1270, %v1277
    %v1280 = vmul.f32 %v1274, %v1277
    %v1281 = vadd.f32 %v1265, %v1279
    %v1282 = vadd.f32 %v1266, %v1280
    %v1283 = vlaneseq
    %v1284 = vshrl.u32 %v1283, 7
    %v1285 = vsub.s32 7, %v1284
    %v1286 = vrot.slane %v1168, %v1285
    %v1287 = vlaneseq
    %v1288 = vshrl.u32 %v1287, 7
    %v1289 = vsub.s32 7, %v1288
    %v1290 = vrot.slane %v1169, %v1289
    %1291 = vset.pattern.permute.xlu0 7
    %1292 = vperm.xlu0 %1291, %v1170
    %v1293 = vpop.permute.xlu0 %1292
    %v1295 = vmul.f32 %v1286, %v1293
    %v1296 = vmul.f32 %v1290, %v1293
    %v1297 = vadd.f32 %v1281, %v1295
    %v1298 = vadd.f32 %v1282, %v1296
    %1300 = vset.pattern.permute.xlu0 0
    %1301 = vperm.xlu0 %1300, %v1171
    %v1302 = vpop.permute.xlu0 %1301
    %v1304 = vadd.f32 %v1297, %v1302
    %v1305 = vadd.f32 %v1298, %v1302
    %v1306 = vtanh.pop %v1304
    %v1307 = vtanh.pop %v1305
    %v1308 = vld [vmem:[#allocation5 + $0x740] sm:$0x7f]
    %v1309 = vld [vmem:[#allocation5 + $0x750] sm:$0x7f]
    %v1310 = vlaneseq
    %v1311 = vshrl.u32 %v1310, 7
    %v1312 = vsub.s32 0, %v1311
    %v1313 = vrot.slane %v1306, %v1312
    %v1314 = vlaneseq
    %v1315 = vshrl.u32 %v1314, 7
    %v1316 = vsub.s32 0, %v1315
    %v1317 = vrot.slane %v1307, %v1316
    %1319 = vset.pattern.permute.xlu0 0
    %1320 = vperm.xlu0 %1319, %v1308
    %v1321 = vpop.permute.xlu0 %1320
    %v1323 = vmul.f32 %v1313, %v1321
    %v1324 = vmul.f32 %v1317, %v1321
    %v1325 = vlaneseq
    %v1326 = vshrl.u32 %v1325, 7
    %v1327 = vsub.s32 1, %v1326
    %v1328 = vrot.slane %v1306, %v1327
    %v1329 = vlaneseq
    %v1330 = vshrl.u32 %v1329, 7
    %v1331 = vsub.s32 1, %v1330
    %v1332 = vrot.slane %v1307, %v1331
    %1333 = vset.pattern.permute.xlu0 1
    %1334 = vperm.xlu0 %1333, %v1308
    %v1335 = vpop.permute.xlu0 %1334
    %v1337 = vmul.f32 %v1328, %v1335
    %v1338 = vmul.f32 %v1332, %v1335
    %v1339 = vadd.f32 %v1323, %v1337
    %v1340 = vadd.f32 %v1324, %v1338
    %1342 = vset.pattern.permute.xlu0 0
    %1343 = vperm.xlu0 %1342, %v1309
    %v1344 = vpop.permute.xlu0 %1343
    %v1346 = vadd.f32 %v1339, %v1344
    %v1347 = vadd.f32 %v1340, %v1344
    %v1348 = vtanh.pop %v1346
    %v1349 = vtanh.pop %v1347
    %v1350 = vld [vmem:[#allocation5 + $0x760] sm:$0xff]
    %v1351 = vld [vmem:[#allocation5 + $0x770] sm:$0xff]
    %v1352 = vlaneseq
    %v1353 = vshrl.u32 %v1352, 7
    %v1354 = vsub.s32 0, %v1353
    %v1355 = vrot.slane %v1348, %v1354
    %v1356 = vlaneseq
    %v1357 = vshrl.u32 %v1356, 7
    %v1358 = vsub.s32 0, %v1357
    %v1359 = vrot.slane %v1349, %v1358
    %1361 = vset.pattern.permute.xlu0 0
    %1362 = vperm.xlu0 %1361, %v1350
    %v1363 = vpop.permute.xlu0 %1362
    %v1365 = vmul.f32 %v1355, %v1363
    %v1366 = vmul.f32 %v1359, %v1363
    %v1367 = vlaneseq
    %v1368 = vshrl.u32 %v1367, 7
    %v1369 = vsub.s32 1, %v1368
    %v1370 = vrot.slane %v1348, %v1369
    %v1371 = vlaneseq
    %v1372 = vshrl.u32 %v1371, 7
    %v1373 = vsub.s32 1, %v1372
    %v1374 = vrot.slane %v1349, %v1373
    %1375 = vset.pattern.permute.xlu0 1
    %1376 = vperm.xlu0 %1375, %v1350
    %v1377 = vpop.permute.xlu0 %1376
    %v1379 = vmul.f32 %v1370, %v1377
    %v1380 = vmul.f32 %v1374, %v1377
    %v1381 = vadd.f32 %v1365, %v1379
    %v1382 = vadd.f32 %v1366, %v1380
    %v1383 = vlaneseq
    %v1384 = vshrl.u32 %v1383, 7
    %v1385 = vsub.s32 2, %v1384
    %v1386 = vrot.slane %v1348, %v1385
    %v1387 = vlaneseq
    %v1388 = vshrl.u32 %v1387, 7
    %v1389 = vsub.s32 2, %v1388
    %v1390 = vrot.slane %v1349, %v1389
    %1391 = vset.pattern.permute.xlu0 2
    %1392 = vperm.xlu0 %1391, %v1350
    %v1393 = vpop.permute.xlu0 %1392
    %v1395 = vmul.f32 %v1386, %v1393
    %v1396 = vmul.f32 %v1390, %v1393
    %v1397 = vadd.f32 %v1381, %v1395
    %v1398 = vadd.f32 %v1382, %v1396
    %v1399 = vlaneseq
    %v1400 = vshrl.u32 %v1399, 7
    %v1401 = vsub.s32 3, %v1400
    %v1402 = vrot.slane %v1348, %v1401
    %v1403 = vlaneseq
    %v1404 = vshrl.u32 %v1403, 7
    %v1405 = vsub.s32 3, %v1404
    %v1406 = vrot.slane %v1349, %v1405
    %1407 = vset.pattern.permute.xlu0 3
    %1408 = vperm.xlu0 %1407, %v1350
    %v1409 = vpop.permute.xlu0 %1408
    %v1411 = vmul.f32 %v1402, %v1409
    %v1412 = vmul.f32 %v1406, %v1409
    %v1413 = vadd.f32 %v1397, %v1411
    %v1414 = vadd.f32 %v1398, %v1412
    %v1415 = vlaneseq
    %v1416 = vshrl.u32 %v1415, 7
    %v1417 = vsub.s32 4, %v1416
    %v1418 = vrot.slane %v1348, %v1417
    %v1419 = vlaneseq
    %v1420 = vshrl.u32 %v1419, 7
    %v1421 = vsub.s32 4, %v1420
    %v1422 = vrot.slane %v1349, %v1421
    %1423 = vset.pattern.permute.xlu0 4
    %1424 = vperm.xlu0 %1423, %v1350
    %v1425 = vpop.permute.xlu0 %1424
    %v1427 = vmul.f32 %v1418, %v1425
    %v1428 = vmul.f32 %v1422, %v1425
    %v1429 = vadd.f32 %v1413, %v1427
    %v1430 = vadd.f32 %v1414, %v1428
    %v1431 = vlaneseq
    %v1432 = vshrl.u32 %v1431, 7
    %v1433 = vsub.s32 5, %v1432
    %v1434 = vrot.slane %v1348, %v1433
    %v1435 = vlaneseq
    %v1436 = vshrl.u32 %v1435, 7
    %v1437 = vsub.s32 5, %v1436
    %v1438 = vrot.slane %v1349, %v1437
    %1439 = vset.pattern.permute.xlu0 5
    %1440 = vperm.xlu0 %1439, %v1350
    %v1441 = vpop.permute.xlu0 %1440
    %v1443 = vmul.f32 %v1434, %v1441
    %v1444 = vmul.f32 %v1438, %v1441
    %v1445 = vadd.f32 %v1429, %v1443
    %v1446 = vadd.f32 %v1430, %v1444
    %v1447 = vlaneseq
    %v1448 = vshrl.u32 %v1447, 7
    %v1449 = vsub.s32 6, %v1448
    %v1450 = vrot.slane %v1348, %v1449
    %v1451 = vlaneseq
    %v1452 = vshrl.u32 %v1451, 7
    %v1453 = vsub.s32 6, %v1452
    %v1454 = vrot.slane %v1349, %v1453
    %1455 = vset.pattern.permute.xlu0 6
    %1456 = vperm.xlu0 %1455, %v1350
    %v1457 = vpop.permute.xlu0 %1456
    %v1459 = vmul.f32 %v1450, %v1457
    %v1460 = vmul.f32 %v1454, %v1457
    %v1461 = vadd.f32 %v1445, %v1459
    %v1462 = vadd.f32 %v1446, %v1460
    %1464 = vset.pattern.permute.xlu0 0
    %1465 = vperm.xlu0 %1464, %v1351
    %v1466 = vpop.permute.xlu0 %1465
    %v1468 = vadd.f32 %v1461, %v1466
    %v1469 = vadd.f32 %v1462, %v1466
    %v1470 = vadd.f32 %v1122, %v1468
    %v1471 = vadd.f32 %v1123, %v1469
    %v1472 = vcombine.high %v1470, 0.0
    %v1474 = vunpack.c.l.s4 1983009808
    %v1475 = vunpack.c.0.s8 %v1474
    %v1476 = vlaneseq
    %v1477 = vshrl.u32 %v1476, 7
    %v1478 = vsub.s32 %v1475, %v1477
    %v1479 = vrot.slane %v1470, %v1478
    %v1481 = vunpack.c.l.s4 1983009808
    %v1482 = vunpack.c.0.s8 %v1481
    %v1483 = vlaneseq
    %v1484 = vshrl.u32 %v1483, 7
    %v1485 = vsub.s32 %v1482, %v1484
    %v1486 = vrot.slane %v1472, %v1485
    %v1487 = vcombine.high %v1471, 0.0
    %v1489 = vunpack.c.l.s4 1983009808
    %v1490 = vunpack.c.0.s8 %v1489
    %v1491 = vlaneseq
    %v1492 = vshrl.u32 %v1491, 7
    %v1493 = vsub.s32 %v1490, %v1492
    %v1494 = vrot.slane %v1471, %v1493
    %v1496 = vunpack.c.l.s4 1983009808
    %v1497 = vunpack.c.0.s8 %v1496
    %v1498 = vlaneseq
    %v1499 = vshrl.u32 %v1498, 7
    %v1500 = vsub.s32 %v1497, %v1499
    %v1501 = vrot.slane %v1487, %v1500
    %v1502 = vcombine.low %v1479, %v1494
    %v1503 = vcombine.high %v1479, %v1494
    %v1505 = vunpack.c.l.s4 1934713408
    %v1506 = vunpack.c.0.s8 %v1505
    %v1507 = vlaneseq
    %v1508 = vshrl.u32 %v1507, 7
    %v1509 = vsub.s32 %v1506, %v1508
    %v1510 = vrot.slane %v1502, %v1509
    %v1512 = vunpack.c.l.s4 1934713408
    %v1513 = vunpack.c.0.s8 %v1512
    %v1514 = vlaneseq
    %v1515 = vshrl.u32 %v1514, 7
    %v1516 = vsub.s32 %v1513, %v1515
    %v1517 = vrot.slane %v1503, %v1516
    %v1518 = vcombine.low %v1486, %v1501
    %v1519 = vcombine.high %v1486, %v1501
    %v1521 = vunpack.c.l.s4 1934713408
    %v1522 = vunpack.c.0.s8 %v1521
    %v1523 = vlaneseq
    %v1524 = vshrl.u32 %v1523, 7
    %v1525 = vsub.s32 %v1522, %v1524
    %v1526 = vrot.slane %v1518, %v1525
    %v1528 = vunpack.c.l.s4 1934713408
    %v1529 = vunpack.c.0.s8 %v1528
    %v1530 = vlaneseq
    %v1531 = vshrl.u32 %v1530, 7
    %v1532 = vsub.s32 %v1529, %v1531
    %v1533 = vrot.slane %v1519, %v1532
    %v1534 = vcombine.high %v1510, 0.0
    %v1535 = vcombine.high %v1517, 0.0
    %v1536 = vcombine.high %v1526, 0.0
    %v1537 = vcombine.high %v1533, 0.0
    %1539 = vrot.lane.b32.xlu0 %v1534, 16
    %v1540 = vpop.permute.xlu0 %1539
    %1543 = vrot.lane.b32.xlu0 %v1517, 32
    %v1544 = vpop.permute.xlu0 %1543
    %1547 = vrot.lane.b32.xlu0 %v1535, 48
    %v1548 = vpop.permute.xlu0 %1547
    %1551 = vrot.lane.b32.xlu0 %v1526, 64
    %v1552 = vpop.permute.xlu0 %1551
    %1555 = vrot.lane.b32.xlu0 %v1536, 80
    %v1556 = vpop.permute.xlu0 %1555
    %1559 = vrot.lane.b32.xlu0 %v1533, 96
    %v1560 = vpop.permute.xlu0 %1559
    %1563 = vrot.lane.b32.xlu0 %v1537, 112
    %v1564 = vpop.permute.xlu0 %1563
    %v1566 = vsel %vm44, %v1510, %v1540
    %vm1567 = vcmask 261120
    %v1568 = vsel %vm1567, %v1566, %v1544
    %vm1569 = vcmask 392192
    %v1570 = vsel %vm1569, %v1568, %v1548
    %vm1571 = vcmask 523264
    %v1572 = vsel %vm1571, %v1570, %v1552
    %vm1573 = vcmask 654336
    %v1574 = vsel %vm1573, %v1572, %v1556
    %vm1575 = vcmask 785408
    %v1576 = vsel %vm1575, %v1574, %v1560
    %vm1577 = vcmask 916480
    %v1578 = vsel %vm1577, %v1576, %v1564
    %v1579 = vld [vmem:[#allocation2] sm:$0xff]
    %v1580 = vcombine.high %v40, 0.0
    %v1582 = vunpack.c.l.s4 1983009808
    %v1583 = vunpack.c.0.s8 %v1582
    %v1584 = vlaneseq
    %v1585 = vshrl.u32 %v1584, 7
    %v1586 = vsub.s32 %v1583, %v1585
    %v1587 = vrot.slane %v1579, %v1586
    %v1589 = vunpack.c.l.s4 1983009808
    %v1590 = vunpack.c.0.s8 %v1589
    %v1591 = vlaneseq
    %v1592 = vshrl.u32 %v1591, 7
    %v1593 = vsub.s32 %v1590, %v1592
    %v1594 = vrot.slane %v1580, %v1593
    %v1595 = vld [vmem:[#allocation2 + $0x8] sm:$0xff]
    %v1596 = vcombine.high %v41, 0.0
    %v1598 = vunpack.c.l.s4 1983009808
    %v1599 = vunpack.c.0.s8 %v1598
    %v1600 = vlaneseq
    %v1601 = vshrl.u32 %v1600, 7
    %v1602 = vsub.s32 %v1599, %v1601
    %v1603 = vrot.slane %v1595, %v1602
    %v1605 = vunpack.c.l.s4 1983009808
    %v1606 = vunpack.c.0.s8 %v1605
    %v1607 = vlaneseq
    %v1608 = vshrl.u32 %v1607, 7
    %v1609 = vsub.s32 %v1606, %v1608
    %v1610 = vrot.slane %v1596, %v1609
    %v1611 = vcombine.low %v1587, %v1603
    %v1612 = vcombine.high %v1587, %v1603
    %v1614 = vunpack.c.l.s4 1934713408
    %v1615 = vunpack.c.0.s8 %v1614
    %v1616 = vlaneseq
    %v1617 = vshrl.u32 %v1616, 7
    %v1618 = vsub.s32 %v1615, %v1617
    %v1619 = vrot.slane %v1611, %v1618
    %v1621 = vunpack.c.l.s4 1934713408
    %v1622 = vunpack.c.0.s8 %v1621
    %v1623 = vlaneseq
    %v1624 = vshrl.u32 %v1623, 7
    %v1625 = vsub.s32 %v1622, %v1624
    %v1626 = vrot.slane %v1612, %v1625
    %v1627 = vcombine.low %v1594, %v1610
    %v1628 = vcombine.high %v1594, %v1610
    %v1630 = vunpack.c.l.s4 1934713408
    %v1631 = vunpack.c.0.s8 %v1630
    %v1632 = vlaneseq
    %v1633 = vshrl.u32 %v1632, 7
    %v1634 = vsub.s32 %v1631, %v1633
    %v1635 = vrot.slane %v1627, %v1634
    %v1637 = vunpack.c.l.s4 1934713408
    %v1638 = vunpack.c.0.s8 %v1637
    %v1639 = vlaneseq
    %v1640 = vshrl.u32 %v1639, 7
    %v1641 = vsub.s32 %v1638, %v1640
    %v1642 = vrot.slane %v1628, %v1641
    %v1643 = vcombine.high %v1619, 0.0
    %v1644 = vcombine.high %v1626, 0.0
    %v1645 = vcombine.high %v1635, 0.0
    %v1646 = vcombine.high %v1642, 0.0
    %1648 = vrot.lane.b32.xlu0 %v1643, 16
    %v1649 = vpop.permute.xlu0 %1648
    %1652 = vrot.lane.b32.xlu0 %v1626, 32
    %v1653 = vpop.permute.xlu0 %1652
    %1656 = vrot.lane.b32.xlu0 %v1644, 48
    %v1657 = vpop.permute.xlu0 %1656
    %1660 = vrot.lane.b32.xlu0 %v1635, 64
    %v1661 = vpop.permute.xlu0 %1660
    %1664 = vrot.lane.b32.xlu0 %v1645, 80
    %v1665 = vpop.permute.xlu0 %1664
    %1668 = vrot.lane.b32.xlu0 %v1642, 96
    %v1669 = vpop.permute.xlu0 %1668
    %1672 = vrot.lane.b32.xlu0 %v1646, 112
    %v1673 = vpop.permute.xlu0 %1672
    %v1675 = vsel %vm44, %v1619, %v1649
    %v1676 = vsel %vm1567, %v1675, %v1653
    %v1677 = vsel %vm1569, %v1676, %v1657
    %v1678 = vsel %vm1571, %v1677, %v1661
    %v1679 = vsel %vm1573, %v1678, %v1665
    %v1680 = vsel %vm1575, %v1679, %v1669
    %v1681 = vsel %vm1577, %v1680, %v1673
    %v1682 = vld [vmem:[#allocation5 + $0x7a0] sm:$0xff]
    %v1683 = vld [vmem:[#allocation5 + $0x7b0] sm:$0xff]
    %v1684 = vld [vmem:[#allocation5 + $0x7c0] sm:$0xff]
    %v1685 = vld [vmem:[#allocation5 + $0x7d0] sm:$0xff]
    %v1686 = vld [vmem:[#allocation5 + $0x7e0] sm:$0xff]
    %v1687 = vld [vmem:[#allocation5 + $0x7f0] sm:$0xff]
    %v1688 = vld [vmem:[#allocation5 + $0x800] sm:$0xff]
    %v1689 = vld [vmem:[#allocation5 + $0x810] sm:$0xff]
    %v1690 = vld [vmem:[#allocation5 + $0x820] sm:$0xff]
    %v1691 = vld [vmem:[#allocation5 + $0x830] sm:$0xff]
    %v1692 = vld [vmem:[#allocation5 + $0x840] sm:$0xff]
    %v1693 = vld [vmem:[#allocation5 + $0x850] sm:$0xff]
    %v1694 = vld [vmem:[#allocation5 + $0x860] sm:$0xff]
    %v1695 = vld [vmem:[#allocation5 + $0x870] sm:$0xff]
    %v1696 = vld [vmem:[#allocation5 + $0x880] sm:$0xff]
    %v1697 = vld [vmem:[#allocation5 + $0x890] sm:$0xff]
    %v1698 = vld [vmem:[#allocation5 + $0x8a0] sm:$0xff]
    %v1699 = vld [vmem:[#allocation5 + $0x8b0] sm:$0xff]
    %v1700 = vld [vmem:[#allocation5 + $0x8c0] sm:$0xff]
    %v1701 = vld [vmem:[#allocation5 + $0x8d0] sm:$0xff]
    %v1702 = vld [vmem:[#allocation5 + $0x8e0] sm:$0xff]
    %v1703 = vld [vmem:[#allocation5 + $0x8f0] sm:$0xff]
    %v1704 = vld [vmem:[#allocation5 + $0x900] sm:$0xff]
    %v1705 = vld [vmem:[#allocation5 + $0x910] sm:$0xff]
    %v1706 = vld [vmem:[#allocation5 + $0x920] sm:$0xff]
    %v1707 = vld [vmem:[#allocation5 + $0x930] sm:$0xff]
    %v1708 = vld [vmem:[#allocation5 + $0x940] sm:$0xff]
    %v1709 = vld [vmem:[#allocation5 + $0x950] sm:$0xff]
    %v1710 = vld [vmem:[#allocation5 + $0x960] sm:$0xff]
    %v1711 = vld [vmem:[#allocation5 + $0x970] sm:$0xff]
    %v1712 = vld [vmem:[#allocation5 + $0x980] sm:$0xff]
    %v1713 = vld [vmem:[#allocation5 + $0x990] sm:$0xff]
    %v1714 = vld [vmem:[#allocation5 + $0x9a0] ss:$0 sm:$0xff]
    %1715 = vmatprep.subr.mxu0 0.0
    %1716 = vmatpush1.msra.mxu0 %v1682
    %1717 = vmatprep.subr.mxu0 0.0
    %1718 = vmatpush1.msra.mxu0 %v1683
    %1719 = vmatprep.subr.mxu0 0.0
    %1720 = vmatpush1.msra.mxu0 %v1684
    %1721 = vmatprep.subr.mxu0 0.0
    %1722 = vmatpush1.msra.mxu0 %v1685
    %1723 = vmatprep.subr.mxu0 0.0
    %1724 = vmatpush1.msra.mxu0 %v1686
    %1725 = vmatprep.subr.mxu0 0.0
    %1726 = vmatpush1.msra.mxu0 %v1687
    %1727 = vmatprep.subr.mxu0 0.0
    %1728 = vmatpush1.msra.mxu0 %v1688
    %1729 = vmatprep.subr.mxu0 0.0
    %1730 = vmatpush1.msra.mxu0 %v1689
    %1731 = vmatprep.subr.mxu0 0.0
    %1732 = vmatpush1.msra.mxu0 %v1690
    %1733 = vmatprep.subr.mxu0 0.0
    %1734 = vmatpush1.msra.mxu0 %v1691
    %1735 = vmatprep.subr.mxu0 0.0
    %1736 = vmatpush1.msra.mxu0 %v1692
    %1737 = vmatprep.subr.mxu0 0.0
    %1738 = vmatpush1.msra.mxu0 %v1693
    %1739 = vmatprep.subr.mxu0 0.0
    %1740 = vmatpush1.msra.mxu0 %v1694
    %1741 = vmatprep.subr.mxu0 0.0
    %1742 = vmatpush1.msra.mxu0 %v1695
    %1743 = vmatprep.subr.mxu0 0.0
    %1744 = vmatpush1.msra.mxu0 %v1696
    %1745 = vmatprep.subr.mxu0 0.0
    %1746 = vmatpush1.msra.mxu0 %v1697
    %1747 = vmatprep.subr.mxu0 0.0
    %1748 = vmatpush1.msra.mxu0 %v1698
    %1749 = vmatprep.subr.mxu0 0.0
    %1750 = vmatpush1.msra.mxu0 %v1699
    %1751 = vmatprep.subr.mxu0 0.0
    %1752 = vmatpush1.msra.mxu0 %v1700
    %1753 = vmatprep.subr.mxu0 0.0
    %1754 = vmatpush1.msra.mxu0 %v1701
    %1755 = vmatprep.subr.mxu0 0.0
    %1756 = vmatpush1.msra.mxu0 %v1702
    %1757 = vmatprep.subr.mxu0 0.0
    %1758 = vmatpush1.msra.mxu0 %v1703
    %1759 = vmatprep.subr.mxu0 0.0
    %1760 = vmatpush1.msra.mxu0 %v1704
    %1761 = vmatprep.subr.mxu0 0.0
    %1762 = vmatpush1.msra.mxu0 %v1705
    %1763 = vmatprep.subr.mxu0 0.0
    %1764 = vmatpush1.msra.mxu0 %v1706
    %1765 = vmatprep.subr.mxu0 0.0
    %1766 = vmatpush1.msra.mxu0 %v1707
    %1767 = vmatprep.subr.mxu0 0.0
    %1768 = vmatpush1.msra.mxu0 %v1708
    %1769 = vmatprep.subr.mxu0 0.0
    %1770 = vmatpush1.msra.mxu0 %v1709
    %1771 = vmatprep.subr.mxu0 0.0
    %1772 = vmatpush1.msra.mxu0 %v1710
    %1773 = vmatprep.subr.mxu0 0.0
    %1774 = vmatpush1.msra.mxu0 %v1711
    %1775 = vmatprep.subr.mxu0 0.0
    %1776 = vmatpush1.msra.mxu0 %v1712
    %1777 = vmatprep.subr.mxu0 0.0
    %1778 = vmatpush1.msra.mxu0 %v1713
    %1779 = vmatprep.mubr.f32.mxu0 %v1578
    %1780 = vmatmul.mubr.f32.gmra.mrb[0].mxu0 %v1681
    %v1781 = vpop.f32.mrb[0].mxu0
    %v1782 = vadd.f32 %v1714, %v1781
    %v1783 = vpop.f32.mrb[0].mxu0
    %1784 = vdwg.mxu0
    %v1785 = vtanh.pop %v1782
    %v1786 = vld [vmem:[#allocation5 + $0x9b0] sm:$0xff]
    %v1787 = vld [vmem:[#allocation5 + $0x9c0] sm:$0xff]
    %v1788 = vld [vmem:[#allocation5 + $0x9d0] sm:$0xff]
    %v1789 = vld [vmem:[#allocation5 + $0x9e0] sm:$0xff]
    %v1790 = vld [vmem:[#allocation5 + $0x9f0] sm:$0xff]
    %v1791 = vld [vmem:[#allocation5 + $0xa00] sm:$0xff]
    %v1792 = vld [vmem:[#allocation5 + $0xa10] sm:$0xff]
    %v1793 = vld [vmem:[#allocation5 + $0xa20] sm:$0xff]
    %v1794 = vld [vmem:[#allocation5 + $0xa30] sm:$0xff]
    %v1795 = vld [vmem:[#allocation5 + $0xa40] sm:$0xff]
    %v1796 = vld [vmem:[#allocation5 + $0xa50] sm:$0xff]
    %v1797 = vld [vmem:[#allocation5 + $0xa60] sm:$0xff]
    %v1798 = vld [vmem:[#allocation5 + $0xa70] sm:$0xff]
    %v1799 = vld [vmem:[#allocation5 + $0xa80] sm:$0xff]
    %v1800 = vld [vmem:[#allocation5 + $0xa90] sm:$0xff]
    %v1801 = vld [vmem:[#allocation5 + $0xaa0] sm:$0xff]
    %v1802 = vld [vmem:[#allocation5 + $0xab0] ss:$0 sm:$0xff]
    %1803 = vmatprep.subr.mxu0 0.0
    %1804 = vmatpush1.msra.mxu0 %v1786
    %1805 = vmatprep.subr.mxu0 0.0
    %1806 = vmatpush1.msra.mxu0 %v1787
    %1807 = vmatprep.subr.mxu0 0.0
    %1808 = vmatpush1.msra.mxu0 %v1788
    %1809 = vmatprep.subr.mxu0 0.0
    %1810 = vmatpush1.msra.mxu0 %v1789
    %1811 = vmatprep.subr.mxu0 0.0
    %1812 = vmatpush1.msra.mxu0 %v1790
    %1813 = vmatprep.subr.mxu0 0.0
    %1814 = vmatpush1.msra.mxu0 %v1791
    %1815 = vmatprep.subr.mxu0 0.0
    %1816 = vmatpush1.msra.mxu0 %v1792
    %1817 = vmatprep.subr.mxu0 0.0
    %1818 = vmatpush1.msra.mxu0 %v1793
    %1819 = vmatprep.subr.mxu0 0.0
    %1820 = vmatpush1.msra.mxu0 %v1794
    %1821 = vmatprep.subr.mxu0 0.0
    %1822 = vmatpush1.msra.mxu0 %v1795
    %1823 = vmatprep.subr.mxu0 0.0
    %1824 = vmatpush1.msra.mxu0 %v1796
    %1825 = vmatprep.subr.mxu0 0.0
    %1826 = vmatpush1.msra.mxu0 %v1797
    %1827 = vmatprep.subr.mxu0 0.0
    %1828 = vmatpush1.msra.mxu0 %v1798
    %1829 = vmatprep.subr.mxu0 0.0
    %1830 = vmatpush1.msra.mxu0 %v1799
    %1831 = vmatprep.subr.mxu0 0.0
    %1832 = vmatpush1.msra.mxu0 %v1800
    %1833 = vmatprep.subr.mxu0 0.0
    %1834 = vmatpush1.msra.mxu0 %v1801
    %1835 = vmatprep.subr.mxu0 0.0
    %1836 = vmatpush1.msra.mxu0 0.0
    %1837 = vmatprep.subr.mxu0 0.0
    %1838 = vmatpush1.msra.mxu0 0.0
    %1839 = vmatprep.subr.mxu0 0.0
    %1840 = vmatpush1.msra.mxu0 0.0
    %1841 = vmatprep.subr.mxu0 0.0
    %1842 = vmatpush1.msra.mxu0 0.0
    %1843 = vmatprep.subr.mxu0 0.0
    %1844 = vmatpush1.msra.mxu0 0.0
    %1845 = vmatprep.subr.mxu0 0.0
    %1846 = vmatpush1.msra.mxu0 0.0
    %1847 = vmatprep.subr.mxu0 0.0
    %1848 = vmatpush1.msra.mxu0 0.0
    %1849 = vmatprep.subr.mxu0 0.0
    %1850 = vmatpush1.msra.mxu0 0.0
    %1851 = vmatprep.subr.mxu0 0.0
    %1852 = vmatpush1.msra.mxu0 0.0
    %1853 = vmatprep.subr.mxu0 0.0
    %1854 = vmatpush1.msra.mxu0 0.0
    %1855 = vmatprep.subr.mxu0 0.0
    %1856 = vmatpush1.msra.mxu0 0.0
    %1857 = vmatprep.subr.mxu0 0.0
    %1858 = vmatpush1.msra.mxu0 0.0
    %1859 = vmatprep.subr.mxu0 0.0
    %1860 = vmatpush1.msra.mxu0 0.0
    %1861 = vmatprep.subr.mxu0 0.0
    %1862 = vmatpush1.msra.mxu0 0.0
    %1863 = vmatprep.subr.mxu0 0.0
    %1864 = vmatpush1.msra.mxu0 0.0
    %1865 = vmatprep.subr.mxu0 0.0
    %1866 = vmatpush1.msra.mxu0 0.0
    %1867 = vmatprep.mubr.f32.mxu0 0.0
    %1868 = vmatmul.mubr.f32.gmra.mrb[0].mxu0 %v1785
    %v1869 = vpop.f32.mrb[0].mxu0
    %v1870 = vadd.f32 %v1802, %v1869
    %v1871 = vpop.f32.mrb[0].mxu0
    %1872 = vdwg.mxu0
    %1873 = vst [vmem:[#allocation7] sm:$0x3] %v1870
    // Predicated region
    $region18: #{tpu_custom_call.1} parent=1 // pred_check
      _
    $region19: #{tpu_custom_call.1} parent=1 // pred_check_branch
      %1875 = sbr.rel (0) target = $region21
    $region20: #{tpu_custom_call.1} parent=1 // pred_region
      %s1877 = ssub.s32 32, 32
      %1878 = vsyncadd [#allocation4], %s1877
      %s1880 = sshll.u32 [#allocation7], 4
      %s1881 = int_to_ptr.vmem [resolvable:$true] %s1880
      %1883 = dma.vmem_to_hbm [thread:$0]  %s1881, 32, %s2, [#allocation4]
    $region21: #{tpu_custom_call.1} parent=1 // pred_fallthru
      _
    // Predicated region
    $region22: #{tpu_custom_call.1} parent=1 // pred_check
      _
    $region23: #{tpu_custom_call.1} parent=1 // pred_check_branch
      %1885 = sbr.rel (0) target = $region25
    $region24: #{tpu_custom_call.1} parent=1 // pred_region
      %1886 = dma.done [#allocation4], 32
    $region25: #{tpu_custom_call.1} parent=1 // pred_fallthru
      _
    %1887 = vsyncpa [#allocation3], 1
    %1888 = vsyncpa [#allocation6], 1
    %1889 = vsyncpa [#allocation4], 1

</llo_original>
